<compile_context>
chip_gen: v5e
topology: v5e:2x2
jax: 0.10.0
libtpu: 0.0.40
codegen_flags: <defaults>
</compile_context>

<pallas_src>
import jax
import jax.numpy as jnp
from jax import lax
from jax.experimental import pallas as pl
from jax.experimental.pallas import tpu as pltpu


def _make_kernel(H, W, clip_total):
    P = H * W

    def kernel(x_ref, wconv_ref, bconv_ref, wneck_ref, bneck_ref,
               whead_ref, bhead_ref, out_ref, accl_ref):
        NT, CT, D, _ = x_ref.shape
        B = NT * CT
        F = wconv_ref.shape[0]
        Kp = out_ref.shape[-1]

        # (NT, CT, D, P) -> (B, D, P): leading-dim merge, free.
        x = x_ref[...].reshape(B, D, P)

        # Zero-pad the flattened spatial axis by (W+1) on each side (bf16, in VMEM).
        # This handles the kh (row) boundary of the 3x3 'SAME' conv for every tap.
        zpad = jnp.zeros((B, D, W + 1), jnp.bfloat16)
        xpad = jnp.concatenate([zpad, x, zpad], axis=-1)          # (B, D, P + 2W + 2)

        # Static masks (depend only on kw) for the row-wrap positions of the flat layout.
        col_w = jax.lax.broadcasted_iota(jnp.int32, (1, 1, P), 2) % W
        not_left = col_w != 0            # kw == 0 is invalid where w == 0
        not_right = col_w != (W - 1)     # kw == 2 is invalid where w == W-1
        zero = jnp.zeros((), jnp.bfloat16)

        # Broadcast conv weights once for the batched matmuls (tiny).
        wcb = jnp.broadcast_to(wconv_ref[...][None, :, :], (B, F, 9 * D))

        # f32 conv accumulator, initialized with the conv bias -> saves a bias pass.
        acc = jnp.broadcast_to(bconv_ref[...][None, :, :], (B, F, P)).astype(jnp.float32)

        # --- backbone conv: 9 taps = static lane slices of xpad, masked, MXU-accumulated.
        # No im2col slab is materialized (review option (a)); contraction K = D per tap.
        dn = (((2,), (1,)), ((0,), (0,)))        # contract d, batch b -> (B, F, P)
        for kh in range(3):
            for kw in range(3):
                t = kh * 3 + kw
                start = kh * W + kw              # == (W+1) + (kh-1)*W + (kw-1)
                tap = xpad[:, :, start:start + P]                     # (B, D, P) bf16
                if kw == 0:
                    tap = jnp.where(not_left, tap, zero)
                elif kw == 2:
                    tap = jnp.where(not_right, tap, zero)
                w_t = wcb[:, :, t * D:(t + 1) * D]                    # (B, F, D) bf16
                acc = acc + lax.dot_general(w_t, tap, dn,
                                            preferred_element_type=jnp.float32)

        relu = jnp.maximum(acc, 0.0)                                  # bias already in acc
        pooled = jnp.mean(relu, axis=-1)                              # global avg pool (B, F)

        # --- neck: Linear + ReLU (tiny, f32) ---
        hid = jnp.dot(pooled, wneck_ref[...], preferred_element_type=jnp.float32)
        hid = jnp.maximum(hid + bneck_ref[...], 0.0)                  # (B, HID)

        # --- head: Linear -> logits (K padded to a lane-dense 128) ---
        logits = jnp.dot(hid, whead_ref[...], preferred_element_type=jnp.float32)
        logits = logits + bhead_ref[...]                              # (B, Kp)

        # Partial clip sum for this clip-chunk of this batch tile.
        part = jnp.sum(logits.reshape(NT, CT, Kp), axis=1).reshape(NT, 1, Kp)

        c = pl.program_id(1)

        @pl.when(c == 0)
        def _init():
            accl_ref[...] = jnp.zeros_like(accl_ref)

        accl_ref[...] += part

        @pl.when(c == pl.num_programs(1) - 1)
        def _finalize():
            out_ref[...] = accl_ref[...] * (1.0 / float(clip_total))

    return kernel


def video_model_forward(x, params, label=None, n_tile=None, c_tile=None):
    """x: (N, I, C, D, H, W) float32. Returns {'cls_score': (N, K)} averaged over I*C clips."""
    # TODO(synk): head loss branch (label is not None) and forward_aggregate not implemented.
    N, I, C, D, H, W = x.shape
    clip = I * C
    P = H * W

    wconv = params["wconv_flat"]   # (F, 9*D) bf16, column = (kh*3+kw)*D + cin
    bconv = params["bconv"]        # (F, 1)   f32
    wneck = params["wneck"]        # (F, HID) f32
    bneck = params["bneck"]        # (1, HID) f32
    whead = params["whead"]        # (HID, K) f32
    bhead = params["bhead"]        # (1, K)   f32
    F = wconv.shape[0]
    HID = wneck.shape[1]
    K = whead.shape[1]
    Kp = ((K + 127) // 128) * 128                         # lane-dense output block

    whead_p = jnp.zeros((HID, Kp), jnp.float32).at[:, :K].set(whead)
    bhead_p = jnp.zeros((1, Kp), jnp.float32).at[:, :K].set(bhead)

    # Generation-aware VMEM limit: ~48 MiB on v7x (64 MiB physical), ~96 MiB on v5e/v6e.
    try:
        cap = pltpu.get_tpu_info().vmem_capacity_bytes
    except Exception:
        cap = 64 * 1024 * 1024
    vmem_limit = int(min(0.75 * cap, 112 * 1024 * 1024))
    budget = int(0.8 * vmem_limit)

    def live_bytes(nt, ct):
        # Models the real per-step live set (review item 1): double-buffered bf16 input
        # block, padded bf16 buffer, one transient tap, f32 conv map (x2 for ReLU copy),
        # plus weights / small tensors headroom.  Includes (8,128) tile padding.
        B = nt * ct
        Dp = ((D + 7) // 8) * 8
        Pp = ((P + 127) // 128) * 128
        Pq = ((P + 2 * W + 2 + 127) // 128) * 128
        Fp = ((F + 7) // 8) * 8
        in_blk = nt * ct * Dp * Pp * 2
        xpad = B * Dp * Pq * 2
        tap = B * Dp * Pp * 2
        conv = B * Fp * Pp * 4
        misc = 2 * 1024 * 1024
        return 2 * in_blk + xpad + 2 * tap + 2 * conv + misc

    if n_tile is None or c_tile is None:
        # Keep >=4 (or >=2) steps on the parallel axis so v7x's two TensorCores and the
        # input-DMA pipeline are exercised; then take the largest tile within budget,
        # chunking the clip axis only if a full-clip block does not fit.
        min_steps = 4 if N >= 4 else (2 if N >= 2 else 1)
        n_divs = [t for t in range(N, 0, -1) if N % t == 0 and N // t >= min_steps]
        if not n_divs:
            n_divs = [1]
        c_divs = [c for c in range(clip, 0, -1) if clip % c == 0]
        n_tile, c_tile = n_divs[-1], 1
        picked = False
        for nt in n_divs:                       # descending: largest first
            if live_bytes(nt, clip) <= budget:
                n_tile, c_tile = nt, clip
                picked = True
                break
        if not picked:
            nt = n_divs[-1]
            for ct in c_divs:
                if live_bytes(nt, ct) <= budget:
                    n_tile, c_tile = nt, ct
                    break
            else:
                n_tile, c_tile = nt, 1
    assert N % n_tile == 0 and clip % c_tile == 0

    # Pure reshape + bf16 downcast: x is already (N, clip, D, H*W) contiguous, so the
    # wrapper does NO HBM transpose and the DMA'd block's minor dim is H*W (lane-dense).
    xr = x.reshape(N, clip, D, P).astype(jnp.bfloat16)

    kernel = _make_kernel(H, W, clip)

    out = pl.pallas_call(
        kernel,
        out_shape=jax.ShapeDtypeStruct((N, 1, Kp), jnp.float32),
        grid_spec=pltpu.PrefetchScalarGridSpec(
            num_scalar_prefetch=0,
            grid=(N // n_tile, clip // c_tile),
            in_specs=[
                pl.BlockSpec((n_tile, c_tile, D, P), lambda n, c: (n, c, 0, 0)),
                pl.BlockSpec((F, 9 * D), lambda n, c: (0, 0)),
                pl.BlockSpec((F, 1), lambda n, c: (0, 0)),
                pl.BlockSpec((F, HID), lambda n, c: (0, 0)),
                pl.BlockSpec((1, HID), lambda n, c: (0, 0)),
                pl.BlockSpec((HID, Kp), lambda n, c: (0, 0)),
                pl.BlockSpec((1, Kp), lambda n, c: (0, 0)),
            ],
            out_specs=pl.BlockSpec((n_tile, 1, Kp), lambda n, c: (n, 0, 0)),
            scratch_shapes=[pltpu.VMEM((n_tile, 1, Kp), jnp.float32)],
        ),
        compiler_params=pltpu.CompilerParams(
            # batch-tile axis shards across v7x's 2 TensorCores; clip axis accumulates.
            dimension_semantics=("parallel", "arbitrary"),
            vmem_limit_bytes=vmem_limit,
        ),
    )(xr, wconv, bconv, wneck, bneck, whead_p, bhead_p)

    return {"cls_score": out[:, 0, :K]}


def make_params(key, cin, f, hid, k):
    ks = jax.random.split(key, 6)
    wconv_torch = 0.1 * jax.random.normal(ks[0], (f, cin, 3, 3), jnp.float32)   # OIHW
    wconv_torch = wconv_torch.astype(jnp.bfloat16).astype(jnp.float32)          # bf16-exact
    bconv = 0.1 * jax.random.normal(ks[1], (f,), jnp.float32)
    wneck = 0.1 * jax.random.normal(ks[2], (f, hid), jnp.float32)
    bneck = 0.1 * jax.random.normal(ks[3], (hid,), jnp.float32)
    whead = 0.1 * jax.random.normal(ks[4], (hid, k), jnp.float32)
    bhead = 0.1 * jax.random.normal(ks[5], (k,), jnp.float32)
    # kernel layout: (F, 9*Cin), column index = (kh*3 + kw)*Cin + cin, stored bf16.
    wconv_flat = jnp.transpose(wconv_torch, (0, 2, 3, 1)).reshape(f, 9 * cin)
    return {
        "wconv_torch": wconv_torch,                        # f32 (bf16-exact), for the reference
        "wconv_flat": wconv_flat.astype(jnp.bfloat16),     # (F, 9*Cin) for the kernel
        "bconv": bconv.reshape(f, 1),
        "wneck": wneck,
        "bneck": bneck.reshape(1, hid),
        "whead": whead,
        "bhead": bhead.reshape(1, k),
    }


def reference_forward(x, params):
    """Pure-JAX reference matching the PyTorch forward semantics (f32 compute on the
    same bf16-quantized activations/conv weights the kernel consumes)."""
    N, I, C, D, H, W = x.shape
    clip = I * C
    xq = x.astype(jnp.bfloat16).astype(jnp.float32)
    xr = jnp.transpose(xq, (1, 2, 0, 3, 4, 5)).reshape(clip, N, D, H, W)
    total = None
    for i in range(clip):
        xi = xr[i]                                           # (N, D, H, W) as NCHW
        y = jax.lax.conv_general_dilated(
            xi, params["wconv_torch"], (1, 1), "SAME",
            dimension_numbers=("NCHW", "OIHW", "NCHW"))
        y = jnp.maximum(y + params["bconv"].reshape(1, -1, 1, 1), 0.0)
        pooled = y.mean(axis=(2, 3))                         # (N, F)
        hid = jnp.maximum(pooled @ params["wneck"] + params["bneck"], 0.0)
        logits = hid @ params["whead"] + params["bhead"]
        total = logits if total is None else total + logits
    return total / float(clip)


if __name__ == "__main__":
    key = jax.random.PRNGKey(0)
    kx, kp = jax.random.split(key)

    # small shapes: N=2 batch, I=2 clips, C=1 crops, D=4 "frames" (conv channels), 16x16 spatial
    N, I, C, D, H, W = 2, 2, 1, 4, 16, 16
    F, HID, K = 16, 32, 8

    x = jax.random.normal(kx, (N, I, C, D, H, W), jnp.float32)
    params = make_params(kp, D, F, HID, K)

    out = video_model_forward(x, params)
    logits = jax.block_until_ready(out["cls_score"])

    ref = reference_forward(x, params)
    assert logits.shape == (N, K)
    assert jnp.allclose(logits, ref, atol=2e-3, rtol=2e-3), \
        float(jnp.max(jnp.abs(logits - ref)))

    print("KERNEL_OK")
</pallas_src>

<mosaic_0001>
module attributes {stable_mosaic.version = 11 : i64} {
  func.func @kernel(%arg0: i32, %arg1: i32, %arg2: memref<1x2x4x256xbf16, #tpu.memory_space<vmem>>, %arg3: memref<16x36xbf16, #tpu.memory_space<vmem>>, %arg4: memref<16x1xf32, #tpu.memory_space<vmem>>, %arg5: memref<16x32xf32, #tpu.memory_space<vmem>>, %arg6: memref<1x32xf32, #tpu.memory_space<vmem>>, %arg7: memref<32x128xf32, #tpu.memory_space<vmem>>, %arg8: memref<1x128xf32, #tpu.memory_space<vmem>>, %arg9: memref<1x1x128xf32, #tpu.memory_space<vmem>>, %arg10: memref<1x1x128xf32, #tpu.memory_space<vmem>>) attributes {dimension_semantics = [#tpu.dimension_semantics<parallel>, #tpu.dimension_semantics<arbitrary>], iteration_bounds = array<i64: 2, 1>, scalar_prefetch = 0 : i64, scratch_operands = 1 : i64, tpu.core_type = #tpu.core_type<tc>, window_params = [{transform_indices = @transform_0, window_bounds = array<i64: 1, 2, 4, 256>}, {pipeline_mode = #tpu.pipeline_mode<synchronous>, transform_indices = @transform_1, window_bounds = array<i64: 16, 36>}, {pipeline_mode = #tpu.pipeline_mode<synchronous>, transform_indices = @transform_2, window_bounds = array<i64: 16, 1>}, {pipeline_mode = #tpu.pipeline_mode<synchronous>, transform_indices = @transform_3, window_bounds = array<i64: 16, 32>}, {pipeline_mode = #tpu.pipeline_mode<synchronous>, transform_indices = @transform_4, window_bounds = array<i64: 1, 32>}, {pipeline_mode = #tpu.pipeline_mode<synchronous>, transform_indices = @transform_5, window_bounds = array<i64: 32, 128>}, {pipeline_mode = #tpu.pipeline_mode<synchronous>, transform_indices = @transform_6, window_bounds = array<i64: 1, 128>}, {transform_indices = @transform_7, window_bounds = array<i64: 1, 1, 128>}]} {
    %c0 = arith.constant 0 : index
    %c0_0 = arith.constant 0 : index
    %c0_1 = arith.constant 0 : index
    %c0_2 = arith.constant 0 : index
    %0 = vector.load %arg2[%c0, %c0_0, %c0_1, %c0_2] : memref<1x2x4x256xbf16, #tpu.memory_space<vmem>>, vector<1x2x4x256xbf16>
    %1 = vector.shape_cast %0 : vector<1x2x4x256xbf16> to vector<2x4x256xbf16>
    %cst = arith.constant 0.000000e+00 : bf16
    %2 = vector.broadcast %cst : bf16 to vector<2x4x17xbf16>
    %3 = tpu.concatenate %2, %1, %2 in 2 : vector<2x4x17xbf16>, vector<2x4x256xbf16>, vector<2x4x17xbf16> -> vector<2x4x290xbf16>
    %4 = tpu.iota {dimensions = array<i32: 2>} : vector<1x1x256xi32>
    %c16_i32 = arith.constant 16 : i32
    %c0_i32 = arith.constant 0 : i32
    %5 = arith.cmpi eq, %c16_i32, %c0_i32 : i32
    %c1_i32 = arith.constant 1 : i32
    %6 = arith.select %5, %c1_i32, %c16_i32 : i32
    %7 = vector.broadcast %6 : i32 to vector<1x1x256xi32>
    %8 = arith.remsi %4, %7 : vector<1x1x256xi32>
    %c0_i32_3 = arith.constant 0 : i32
    %9 = vector.broadcast %c0_i32_3 : i32 to vector<1x1x256xi32>
    %10 = arith.cmpi ne, %8, %9 : vector<1x1x256xi32>
    %c0_i32_4 = arith.constant 0 : i32
    %11 = vector.broadcast %c0_i32_4 : i32 to vector<1x1x256xi32>
    %12 = arith.cmpi slt, %8, %11 : vector<1x1x256xi32>
    %c0_i32_5 = arith.constant 0 : i32
    %13 = arith.cmpi slt, %6, %c0_i32_5 : i32
    %14 = vector.broadcast %13 : i1 to vector<1x1x256xi1>
    %15 = vector.broadcast %14 : vector<1x1x256xi1> to vector<1x1x256xi1>
    %16 = arith.xori %12, %15 : vector<1x1x256xi1>
    %17 = arith.andi %16, %10 : vector<1x1x256xi1>
    %18 = vector.broadcast %6 : i32 to vector<1x1x256xi32>
    %19 = arith.addi %8, %18 : vector<1x1x256xi32>
    %20 = arith.select %17, %19, %8 : vector<1x1x256xi1>, vector<1x1x256xi32>
    %c0_i32_6 = arith.constant 0 : i32
    %21 = vector.broadcast %c0_i32_6 : i32 to vector<1x1x256xi32>
    %22 = arith.cmpi ne, %20, %21 : vector<1x1x256xi32>
    %c15_i32 = arith.constant 15 : i32
    %23 = vector.broadcast %c15_i32 : i32 to vector<1x1x256xi32>
    %24 = arith.cmpi ne, %20, %23 : vector<1x1x256xi32>
    %c0_7 = arith.constant 0 : index
    %c0_8 = arith.constant 0 : index
    %25 = vector.load %arg3[%c0_7, %c0_8] : memref<16x36xbf16, #tpu.memory_space<vmem>>, vector<16x36xbf16>
    %26 = vector.shape_cast %25 : vector<16x36xbf16> to vector<1x16x36xbf16>
    %27 = vector.shape_cast %26 : vector<1x16x36xbf16> to vector<1x16x36xbf16>
    %28 = vector.broadcast %27 : vector<1x16x36xbf16> to vector<2x16x36xbf16>
    %c0_9 = arith.constant 0 : index
    %c0_10 = arith.constant 0 : index
    %29 = vector.load %arg4[%c0_9, %c0_10] : memref<16x1xf32, #tpu.memory_space<vmem>>, vector<16x1xf32>
    %30 = vector.shape_cast %29 : vector<16x1xf32> to vector<1x16x1xf32>
    %31 = vector.shape_cast %30 : vector<1x16x1xf32> to vector<1x16x1xf32>
    %32 = vector.broadcast %31 : vector<1x16x1xf32> to vector<2x16x256xf32>
    %33 = vector.extract_strided_slice %3 {offsets = [0, 0, 0], sizes = [2, 4, 256], strides = [1, 1, 1]} : vector<2x4x290xbf16> to vector<2x4x256xbf16>
    %cst_11 = arith.constant 0.000000e+00 : bf16
    %34 = vector.shape_cast %22 : vector<1x1x256xi1> to vector<1x1x256xi1>
    %35 = vector.broadcast %34 : vector<1x1x256xi1> to vector<2x4x256xi1>
    %36 = vector.broadcast %cst_11 : bf16 to vector<2x4x256xbf16>
    %37 = arith.select %35, %33, %36 : vector<2x4x256xi1>, vector<2x4x256xbf16>
    %38 = vector.extract_strided_slice %28 {offsets = [0, 0, 0], sizes = [2, 16, 4], strides = [1, 1, 1]} : vector<2x16x36xbf16> to vector<2x16x4xbf16>
    %cst_12 = arith.constant dense<0.000000e+00> : vector<2x16x256xf32>
    %39 = tpu.matmul %38, %37, %cst_12 {dimension_numbers = #tpu.dot_dimension_numbers<[2], [1], [1], [2], [0, 0, 0, 1, 1, 2], [0], [0]>} : vector<2x16x4xbf16>, vector<2x4x256xbf16>, vector<2x16x256xf32> -> vector<2x16x256xf32>
    %40 = arith.addf %32, %39 : vector<2x16x256xf32>
    %41 = vector.extract_strided_slice %3 {offsets = [0, 0, 1], sizes = [2, 4, 256], strides = [1, 1, 1]} : vector<2x4x290xbf16> to vector<2x4x256xbf16>
    %42 = vector.extract_strided_slice %28 {offsets = [0, 0, 4], sizes = [2, 16, 4], strides = [1, 1, 1]} : vector<2x16x36xbf16> to vector<2x16x4xbf16>
    %cst_13 = arith.constant dense<0.000000e+00> : vector<2x16x256xf32>
    %43 = tpu.matmul %42, %41, %cst_13 {dimension_numbers = #tpu.dot_dimension_numbers<[2], [1], [1], [2], [0, 0, 0, 1, 1, 2], [0], [0]>} : vector<2x16x4xbf16>, vector<2x4x256xbf16>, vector<2x16x256xf32> -> vector<2x16x256xf32>
    %44 = arith.addf %40, %43 : vector<2x16x256xf32>
    %45 = vector.extract_strided_slice %3 {offsets = [0, 0, 2], sizes = [2, 4, 256], strides = [1, 1, 1]} : vector<2x4x290xbf16> to vector<2x4x256xbf16>
    %cst_14 = arith.constant 0.000000e+00 : bf16
    %46 = vector.shape_cast %24 : vector<1x1x256xi1> to vector<1x1x256xi1>
    %47 = vector.broadcast %46 : vector<1x1x256xi1> to vector<2x4x256xi1>
    %48 = vector.broadcast %cst_14 : bf16 to vector<2x4x256xbf16>
    %49 = arith.select %47, %45, %48 : vector<2x4x256xi1>, vector<2x4x256xbf16>
    %50 = vector.extract_strided_slice %28 {offsets = [0, 0, 8], sizes = [2, 16, 4], strides = [1, 1, 1]} : vector<2x16x36xbf16> to vector<2x16x4xbf16>
    %cst_15 = arith.constant dense<0.000000e+00> : vector<2x16x256xf32>
    %51 = tpu.matmul %50, %49, %cst_15 {dimension_numbers = #tpu.dot_dimension_numbers<[2], [1], [1], [2], [0, 0, 0, 1, 1, 2], [0], [0]>} : vector<2x16x4xbf16>, vector<2x4x256xbf16>, vector<2x16x256xf32> -> vector<2x16x256xf32>
    %52 = arith.addf %44, %51 : vector<2x16x256xf32>
    %53 = vector.extract_strided_slice %3 {offsets = [0, 0, 16], sizes = [2, 4, 256], strides = [1, 1, 1]} : vector<2x4x290xbf16> to vector<2x4x256xbf16>
    %cst_16 = arith.constant 0.000000e+00 : bf16
    %54 = vector.shape_cast %22 : vector<1x1x256xi1> to vector<1x1x256xi1>
    %55 = vector.broadcast %54 : vector<1x1x256xi1> to vector<2x4x256xi1>
    %56 = vector.broadcast %cst_16 : bf16 to vector<2x4x256xbf16>
    %57 = arith.select %55, %53, %56 : vector<2x4x256xi1>, vector<2x4x256xbf16>
    %58 = vector.extract_strided_slice %28 {offsets = [0, 0, 12], sizes = [2, 16, 4], strides = [1, 1, 1]} : vector<2x16x36xbf16> to vector<2x16x4xbf16>
    %cst_17 = arith.constant dense<0.000000e+00> : vector<2x16x256xf32>
    %59 = tpu.matmul %58, %57, %cst_17 {dimension_numbers = #tpu.dot_dimension_numbers<[2], [1], [1], [2], [0, 0, 0, 1, 1, 2], [0], [0]>} : vector<2x16x4xbf16>, vector<2x4x256xbf16>, vector<2x16x256xf32> -> vector<2x16x256xf32>
    %60 = arith.addf %52, %59 : vector<2x16x256xf32>
    %61 = vector.extract_strided_slice %3 {offsets = [0, 0, 17], sizes = [2, 4, 256], strides = [1, 1, 1]} : vector<2x4x290xbf16> to vector<2x4x256xbf16>
    %62 = vector.extract_strided_slice %28 {offsets = [0, 0, 16], sizes = [2, 16, 4], strides = [1, 1, 1]} : vector<2x16x36xbf16> to vector<2x16x4xbf16>
    %cst_18 = arith.constant dense<0.000000e+00> : vector<2x16x256xf32>
    %63 = tpu.matmul %62, %61, %cst_18 {dimension_numbers = #tpu.dot_dimension_numbers<[2], [1], [1], [2], [0, 0, 0, 1, 1, 2], [0], [0]>} : vector<2x16x4xbf16>, vector<2x4x256xbf16>, vector<2x16x256xf32> -> vector<2x16x256xf32>
    %64 = arith.addf %60, %63 : vector<2x16x256xf32>
    %65 = vector.extract_strided_slice %3 {offsets = [0, 0, 18], sizes = [2, 4, 256], strides = [1, 1, 1]} : vector<2x4x290xbf16> to vector<2x4x256xbf16>
    %cst_19 = arith.constant 0.000000e+00 : bf16
    %66 = vector.shape_cast %24 : vector<1x1x256xi1> to vector<1x1x256xi1>
    %67 = vector.broadcast %66 : vector<1x1x256xi1> to vector<2x4x256xi1>
    %68 = vector.broadcast %cst_19 : bf16 to vector<2x4x256xbf16>
    %69 = arith.select %67, %65, %68 : vector<2x4x256xi1>, vector<2x4x256xbf16>
    %70 = vector.extract_strided_slice %28 {offsets = [0, 0, 20], sizes = [2, 16, 4], strides = [1, 1, 1]} : vector<2x16x36xbf16> to vector<2x16x4xbf16>
    %cst_20 = arith.constant dense<0.000000e+00> : vector<2x16x256xf32>
    %71 = tpu.matmul %70, %69, %cst_20 {dimension_numbers = #tpu.dot_dimension_numbers<[2], [1], [1], [2], [0, 0, 0, 1, 1, 2], [0], [0]>} : vector<2x16x4xbf16>, vector<2x4x256xbf16>, vector<2x16x256xf32> -> vector<2x16x256xf32>
    %72 = arith.addf %64, %71 : vector<2x16x256xf32>
    %73 = vector.extract_strided_slice %3 {offsets = [0, 0, 32], sizes = [2, 4, 256], strides = [1, 1, 1]} : vector<2x4x290xbf16> to vector<2x4x256xbf16>
    %cst_21 = arith.constant 0.000000e+00 : bf16
    %74 = vector.shape_cast %22 : vector<1x1x256xi1> to vector<1x1x256xi1>
    %75 = vector.broadcast %74 : vector<1x1x256xi1> to vector<2x4x256xi1>
    %76 = vector.broadcast %cst_21 : bf16 to vector<2x4x256xbf16>
    %77 = arith.select %75, %73, %76 : vector<2x4x256xi1>, vector<2x4x256xbf16>
    %78 = vector.extract_strided_slice %28 {offsets = [0, 0, 24], sizes = [2, 16, 4], strides = [1, 1, 1]} : vector<2x16x36xbf16> to vector<2x16x4xbf16>
    %cst_22 = arith.constant dense<0.000000e+00> : vector<2x16x256xf32>
    %79 = tpu.matmul %78, %77, %cst_22 {dimension_numbers = #tpu.dot_dimension_numbers<[2], [1], [1], [2], [0, 0, 0, 1, 1, 2], [0], [0]>} : vector<2x16x4xbf16>, vector<2x4x256xbf16>, vector<2x16x256xf32> -> vector<2x16x256xf32>
    %80 = arith.addf %72, %79 : vector<2x16x256xf32>
    %81 = vector.extract_strided_slice %3 {offsets = [0, 0, 33], sizes = [2, 4, 256], strides = [1, 1, 1]} : vector<2x4x290xbf16> to vector<2x4x256xbf16>
    %82 = vector.extract_strided_slice %28 {offsets = [0, 0, 28], sizes = [2, 16, 4], strides = [1, 1, 1]} : vector<2x16x36xbf16> to vector<2x16x4xbf16>
    %cst_23 = arith.constant dense<0.000000e+00> : vector<2x16x256xf32>
    %83 = tpu.matmul %82, %81, %cst_23 {dimension_numbers = #tpu.dot_dimension_numbers<[2], [1], [1], [2], [0, 0, 0, 1, 1, 2], [0], [0]>} : vector<2x16x4xbf16>, vector<2x4x256xbf16>, vector<2x16x256xf32> -> vector<2x16x256xf32>
    %84 = arith.addf %80, %83 : vector<2x16x256xf32>
    %85 = vector.extract_strided_slice %3 {offsets = [0, 0, 34], sizes = [2, 4, 256], strides = [1, 1, 1]} : vector<2x4x290xbf16> to vector<2x4x256xbf16>
    %cst_24 = arith.constant 0.000000e+00 : bf16
    %86 = vector.shape_cast %24 : vector<1x1x256xi1> to vector<1x1x256xi1>
    %87 = vector.broadcast %86 : vector<1x1x256xi1> to vector<2x4x256xi1>
    %88 = vector.broadcast %cst_24 : bf16 to vector<2x4x256xbf16>
    %89 = arith.select %87, %85, %88 : vector<2x4x256xi1>, vector<2x4x256xbf16>
    %90 = vector.extract_strided_slice %28 {offsets = [0, 0, 32], sizes = [2, 16, 4], strides = [1, 1, 1]} : vector<2x16x36xbf16> to vector<2x16x4xbf16>
    %cst_25 = arith.constant dense<0.000000e+00> : vector<2x16x256xf32>
    %91 = tpu.matmul %90, %89, %cst_25 {dimension_numbers = #tpu.dot_dimension_numbers<[2], [1], [1], [2], [0, 0, 0, 1, 1, 2], [0], [0]>} : vector<2x16x4xbf16>, vector<2x4x256xbf16>, vector<2x16x256xf32> -> vector<2x16x256xf32>
    %92 = arith.addf %84, %91 : vector<2x16x256xf32>
    %cst_26 = arith.constant 0.000000e+00 : f32
    %93 = vector.broadcast %cst_26 : f32 to vector<2x16x256xf32>
    %94 = arith.maximumf %92, %93 : vector<2x16x256xf32>
    %cst_27 = arith.constant dense<0.000000e+00> : vector<2x16xf32>
    %95 = vector.multi_reduction <add>, %94, %cst_27 [2] : vector<2x16x256xf32> to vector<2x16xf32>
    %cst_28 = arith.constant 2.560000e+02 : f32
    %96 = vector.broadcast %cst_28 : f32 to vector<2x16xf32>
    %97 = arith.divf %95, %96 : vector<2x16xf32>
    %c0_29 = arith.constant 0 : index
    %c0_30 = arith.constant 0 : index
    %98 = vector.load %arg5[%c0_29, %c0_30] : memref<16x32xf32, #tpu.memory_space<vmem>>, vector<16x32xf32>
    %cst_31 = arith.constant dense<0.000000e+00> : vector<2x32xf32>
    %99 = tpu.matmul %97, %98, %cst_31 {dimension_numbers = #tpu.dot_dimension_numbers<[1], [0], [0], [1], [0, 0, 1, 1], [], []>} : vector<2x16xf32>, vector<16x32xf32>, vector<2x32xf32> -> vector<2x32xf32>
    %c0_32 = arith.constant 0 : index
    %c0_33 = arith.constant 0 : index
    %100 = vector.load %arg6[%c0_32, %c0_33] : memref<1x32xf32, #tpu.memory_space<vmem>>, vector<1x32xf32>
    %101 = vector.broadcast %100 : vector<1x32xf32> to vector<2x32xf32>
    %102 = arith.addf %99, %101 : vector<2x32xf32>
    %cst_34 = arith.constant 0.000000e+00 : f32
    %103 = vector.broadcast %cst_34 : f32 to vector<2x32xf32>
    %104 = arith.maximumf %102, %103 : vector<2x32xf32>
    %c0_35 = arith.constant 0 : index
    %c0_36 = arith.constant 0 : index
    %105 = vector.load %arg7[%c0_35, %c0_36] : memref<32x128xf32, #tpu.memory_space<vmem>>, vector<32x128xf32>
    %cst_37 = arith.constant dense<0.000000e+00> : vector<2x128xf32>
    %106 = tpu.matmul %104, %105, %cst_37 {dimension_numbers = #tpu.dot_dimension_numbers<[1], [0], [0], [1], [0, 0, 1, 1], [], []>} : vector<2x32xf32>, vector<32x128xf32>, vector<2x128xf32> -> vector<2x128xf32>
    %c0_38 = arith.constant 0 : index
    %c0_39 = arith.constant 0 : index
    %107 = vector.load %arg8[%c0_38, %c0_39] : memref<1x128xf32, #tpu.memory_space<vmem>>, vector<1x128xf32>
    %108 = vector.broadcast %107 : vector<1x128xf32> to vector<2x128xf32>
    %109 = arith.addf %106, %108 : vector<2x128xf32>
    %110 = vector.shape_cast %109 : vector<2x128xf32> to vector<1x2x128xf32>
    %cst_40 = arith.constant dense<0.000000e+00> : vector<1x128xf32>
    %111 = vector.multi_reduction <add>, %110, %cst_40 [1] : vector<1x2x128xf32> to vector<1x128xf32>
    %112 = vector.shape_cast %111 : vector<1x128xf32> to vector<1x1x128xf32>
    %c0_i32_41 = arith.constant 0 : i32
    %113 = arith.cmpi eq, %arg1, %c0_i32_41 : i32
    %114 = arith.extui %113 : i1 to i32
    %c0_i32_42 = arith.constant 0 : i32
    %115 = arith.cmpi ne, %114, %c0_i32_42 : i32
    scf.if %115 {
      %cst_51 = arith.constant 0.000000e+00 : f32
      %122 = vector.broadcast %cst_51 : f32 to vector<1x1x128xf32>
      %c0_52 = arith.constant 0 : index
      %c0_53 = arith.constant 0 : index
      %c0_54 = arith.constant 0 : index
      %123 = vector.load %arg10[%c0_52, %c0_53, %c0_54] : memref<1x1x128xf32, #tpu.memory_space<vmem>>, vector<1x1x128xf32>
      tpu.vector_store %arg10[%c0_52, %c0_53, %c0_54], %122 {strides = array<i32>} : memref<1x1x128xf32, #tpu.memory_space<vmem>>, vector<1x1x128xf32>,
    } else {
    }
    %c0_43 = arith.constant 0 : index
    %c0_44 = arith.constant 0 : index
    %c0_45 = arith.constant 0 : index
    %116 = vector.load %arg10[%c0_43, %c0_44, %c0_45] : memref<1x1x128xf32, #tpu.memory_space<vmem>>, vector<1x1x128xf32>
    %117 = arith.addf %116, %112 : vector<1x1x128xf32>
    %c0_46 = arith.constant 0 : index
    %c0_47 = arith.constant 0 : index
    %c0_48 = arith.constant 0 : index
    %118 = vector.load %arg10[%c0_46, %c0_47, %c0_48] : memref<1x1x128xf32, #tpu.memory_space<vmem>>, vector<1x1x128xf32>
    tpu.vector_store %arg10[%c0_46, %c0_47, %c0_48], %117 {strides = array<i32>} : memref<1x1x128xf32, #tpu.memory_space<vmem>>, vector<1x1x128xf32>,
    %c0_i32_49 = arith.constant 0 : i32
    %119 = arith.cmpi eq, %arg1, %c0_i32_49 : i32
    %120 = arith.extui %119 : i1 to i32
    %c0_i32_50 = arith.constant 0 : i32
    %121 = arith.cmpi ne, %120, %c0_i32_50 : i32
    scf.if %121 {
      %c0_51 = arith.constant 0 : index
      %c0_52 = arith.constant 0 : index
      %c0_53 = arith.constant 0 : index
      %122 = vector.load %arg10[%c0_51, %c0_52, %c0_53] : memref<1x1x128xf32, #tpu.memory_space<vmem>>, vector<1x1x128xf32>
      %cst_54 = arith.constant 5.000000e-01 : f32
      %123 = vector.broadcast %cst_54 : f32 to vector<1x1x128xf32>
      %124 = arith.mulf %122, %123 : vector<1x1x128xf32>
      %c0_55 = arith.constant 0 : index
      %c0_56 = arith.constant 0 : index
      %c0_57 = arith.constant 0 : index
      %125 = vector.load %arg9[%c0_55, %c0_56, %c0_57] : memref<1x1x128xf32, #tpu.memory_space<vmem>>, vector<1x1x128xf32>
      tpu.vector_store %arg9[%c0_55, %c0_56, %c0_57], %124 {strides = array<i32>} : memref<1x1x128xf32, #tpu.memory_space<vmem>>, vector<1x1x128xf32>,
    } else {
    }
    return
  }
  func.func @transform_0(%arg0: i32, %arg1: i32) -> (i32, i32, i32, i32) {
    %c0_i32 = arith.constant 0 : i32
    %c0_i32_0 = arith.constant 0 : i32
    %c0_i32_1 = arith.constant 0 : i32
    return %arg0, %arg1, %c0_i32, %c0_i32_0 : i32, i32, i32, i32
  }
  func.func @transform_1(%arg0: i32, %arg1: i32) -> (i32, i32) {
    %c0_i32 = arith.constant 0 : i32
    %c0_i32_0 = arith.constant 0 : i32
    %c0_i32_1 = arith.constant 0 : i32
    return %c0_i32, %c0_i32_0 : i32, i32
  }
  func.func @transform_2(%arg0: i32, %arg1: i32) -> (i32, i32) {
    %c0_i32 = arith.constant 0 : i32
    %c0_i32_0 = arith.constant 0 : i32
    %c0_i32_1 = arith.constant 0 : i32
    return %c0_i32, %c0_i32_0 : i32, i32
  }
  func.func @transform_3(%arg0: i32, %arg1: i32) -> (i32, i32) {
    %c0_i32 = arith.constant 0 : i32
    %c0_i32_0 = arith.constant 0 : i32
    %c0_i32_1 = arith.constant 0 : i32
    return %c0_i32, %c0_i32_0 : i32, i32
  }
  func.func @transform_4(%arg0: i32, %arg1: i32) -> (i32, i32) {
    %c0_i32 = arith.constant 0 : i32
    %c0_i32_0 = arith.constant 0 : i32
    %c0_i32_1 = arith.constant 0 : i32
    return %c0_i32, %c0_i32_0 : i32, i32
  }
  func.func @transform_5(%arg0: i32, %arg1: i32) -> (i32, i32) {
    %c0_i32 = arith.constant 0 : i32
    %c0_i32_0 = arith.constant 0 : i32
    %c0_i32_1 = arith.constant 0 : i32
    return %c0_i32, %c0_i32_0 : i32, i32
  }
  func.func @transform_6(%arg0: i32, %arg1: i32) -> (i32, i32) {
    %c0_i32 = arith.constant 0 : i32
    %c0_i32_0 = arith.constant 0 : i32
    %c0_i32_1 = arith.constant 0 : i32
    return %c0_i32, %c0_i32_0 : i32, i32
  }
  func.func @transform_7(%arg0: i32, %arg1: i32) -> (i32, i32, i32) {
    %c0_i32 = arith.constant 0 : i32
    %c0_i32_0 = arith.constant 0 : i32
    %c0_i32_1 = arith.constant 0 : i32
    return %arg0, %c0_i32, %c0_i32_0 : i32, i32, i32
  }
}

</mosaic_0001>

<llo_original>
// kernel: tpu_custom_call.1
$region0: #{tpu_custom_call.1}
  #allocation0 [shape = 'u32[]', space=smem, size = 0x4, offset = 0x4, fixed_abs, tag = 'smem constant byte address 0x4 - core index']
  #allocation1 [shape = 'u32[72,128]{1,0:T(1,128)}', space=vmem, size = 0x9000, scoped, tag = 'internal scratch']
  #allocation2 [shape = 'f32[1,1,128]{2,1,0:T(1,128)}', space=vmem, size = 0x200, scoped, tag = 'scratch operand']
  %s0 = inlined_call_operand.vmem [shape: bf16[2,2,4,256], index: 0, kind: input, shape index: {}]
  %s1 = inlined_call_operand.hbm [shape: bf16[16,36], index: 1, kind: input, shape index: {}]
  %s2 = inlined_call_operand.vmem [shape: f32[16,1], index: 2, kind: input, shape index: {}]
  %s3 = inlined_call_operand.hbm [shape: f32[16,32], index: 3, kind: input, shape index: {}]
  %s4 = inlined_call_operand.vmem [shape: f32[1,32], index: 4, kind: input, shape index: {}]
  %s5 = inlined_call_operand.hbm [shape: f32[32,128], index: 5, kind: input, shape index: {}]
  %s6 = inlined_call_operand.vmem [shape: f32[1,128], index: 6, kind: input, shape index: {}]
  %s7 = inlined_call_operand.hbm [shape: f32[2,1,128], index: 7, kind: output, shape index: {}]
  %s8 = sld [smem:[#allocation0]]
  $region81: #{tpu_custom_call.1} parent=0
    _
  %s10 = ssub.s32 1, %s8
  %s11 = scalar_select 0, %s10, %s8
  $region1: #{tpu_custom_call.1} parent=0
    #allocation3 [shape = 'u8[4096]{0}', space=vmem, size = 0x1000, scoped, tag = 'input window, operand 1, single buffered']
    #allocation4 [shape = 's32[2]{0}', space=sflag, size = 0x8, scoped, tag = 'scoped memory for tpu_custom_call.1']
    #allocation5 [shape = 's32[2]{0}', space=sflag, size = 0x8, scoped, tag = 'scoped memory for tpu_custom_call.1']
    #allocation6 [shape = 'u8[8192]{0}', space=vmem, size = 0x2000, scoped, tag = 'input window, operand 3, single buffered']
    #allocation7 [shape = 's32[1]{0}', space=sflag, size = 0x4, scoped, tag = 'scoped memory for tpu_custom_call.1']
    #allocation8 [shape = 'u8[16384]{0}', space=vmem, size = 0x4000, scoped, tag = 'input window, operand 5, single buffered']
    #allocation9 [shape = 'u8[1024]{0}', space=vmem, size = 0x400, scoped, tag = 'output window, operand 0']
    %12 = vsyncpa [#allocation4], 0
    %13 = vsyncpa [#allocation7], 0
    %14 = vsyncpa [#allocation5], 0
    %s15 = scalar_lea.sflag [#allocation5], 1
    %16 = vsyncpa %s15, 0
    loop: start=0, step=1, limit=4
    $region2: #{tpu_custom_call.1} parent=1 // loop_pre_header
      _
    $region3: #{tpu_custom_call.1} parent=1 // loop_header
      %s18 = sphi 0, %s22
      %p19 = scmp.ge.s32.totalorder %s18, 4
      %s25 = sphi 0, %s37
      %s26 = sphi 0, %s33
      %s27 = sphi 0, %s25
      %s28 = sphi 0, %s26
      %s29 = sphi 0, %s27
      %s30 = sphi 0, %s28
      %s42 = sphi 0, %s44
      %s45 = sphi 0, %s42
      %s46 = sphi 0, %s45
      %s62 = sphi 0, %s46
      %s66 = sphi 0, %s66
      %s68 = sphi 0, %s66
      %s69 = sphi 0, %s68
      %s83 = sphi 0, %s69
      %s87 = sphi 0, %s87
      %s89 = sphi 0, %s87
      %s90 = sphi 0, %s89
      %s104 = sphi 0, %s90
      %s108 = sphi 0, %s108
      %s110 = sphi 0, %s108
      %s111 = sphi 0, %s110
      %s125 = sphi 0, %s111
      %s129 = sphi 0, %s129
      %s131 = sphi 0, %s129
      %s132 = sphi 0, %s131
      %s146 = sphi 0, %s132
      %s150 = sphi 0, %s150
      %s152 = sphi 0, %s150
      %s153 = sphi 0, %s152
      %s167 = sphi 0, %s153
      %s171 = sphi 0, %s171
      %s173 = sphi 0, %s171
      %s174 = sphi 0, %s173
      %s188 = sphi 0, %s174
      %s194 = sphi 0, %s196
      %s197 = sphi 0, %s194
      %s198 = sphi 0, %s197
      %s214 = sphi 0, %s198
    $region4: #{tpu_custom_call.1} parent=1 // loop_header_branch
      %21 = sbr.rel (%p19) target = $region8
    $region5: #{tpu_custom_call.1} parent=1 // loop_body
      %s23 = ssub.s32 %s18, 1
      %s24 = ssub.s32 %s18, 2
      %s31 = sadd.s32 1, %s26
      %p32 = scmp.ge.s32.totalorder %s31, 1
      %s33 = scalar_select %p32, 0, %s31
      %s34 = sadd.s32 1, %s25
      %s35 = scalar_select %p32, %s34, %s25
      %p36 = scmp.ge.s32.totalorder %s35, 2
      %s37 = scalar_select %p36, 0, %s35
      %s38 = ssub.s32 %s25, %s37
      %s39 = ssub.s32 %s26, %s33
      %s40 = sor.u32 %s38, %s39
      %p41 = scmp.eq.s32.totalorder %s40, 0
      %s43 = sadd.s32 %s42, 1
      %s44 = scalar_select %p41, %s42, %s43
      %p47 = pneg %p41
      %p48 = scmp.eq.s32.totalorder %s18, 1
      %p49 = por %p47, %p48
      %p50 = scmp.ne.s32.totalorder %s42, %s45
      %p51 = scmp.eq.s32.totalorder %s18, 0
      %p52 = por %p50, %p51
      %p53 = scmp.ne.s32.totalorder %s42, %s45
      %p54 = scmp.eq.s32.totalorder %s23, 1
      %p55 = por %p53, %p54
      %p56 = scmp.ne.s32.totalorder %s45, %s46
      %p57 = scmp.eq.s32.totalorder %s23, 0
      %p58 = por %p56, %p57
      %p59 = scmp.ne.s32.totalorder %s45, %s46
      %p60 = scmp.eq.s32.totalorder %s24, 1
      %p61 = por %p59, %p60
      %p63 = scmp.ne.s32.totalorder %s46, %s62
      %p64 = scmp.eq.s32.totalorder %s24, 0
      %p65 = por %p63, %p64
      %s67 = sadd.s32 %s66, 1
      %p70 = scmp.eq.s32.totalorder %s18, 1
      %p71 = scmp.ne.s32.totalorder %s66, %s68
      %p72 = scmp.eq.s32.totalorder %s18, 0
      %p73 = por %p71, %p72
      %p74 = scmp.ne.s32.totalorder %s66, %s68
      %p75 = scmp.eq.s32.totalorder %s23, 1
      %p76 = por %p74, %p75
      %p77 = scmp.ne.s32.totalorder %s68, %s69
      %p78 = scmp.eq.s32.totalorder %s23, 0
      %p79 = por %p77, %p78
      %p80 = scmp.ne.s32.totalorder %s68, %s69
      %p81 = scmp.eq.s32.totalorder %s24, 1
      %p82 = por %p80, %p81
      %p84 = scmp.ne.s32.totalorder %s69, %s83
      %p85 = scmp.eq.s32.totalorder %s24, 0
      %p86 = por %p84, %p85
      %s88 = sadd.s32 %s87, 1
      %p91 = scmp.eq.s32.totalorder %s18, 1
      %p92 = scmp.ne.s32.totalorder %s87, %s89
      %p93 = scmp.eq.s32.totalorder %s18, 0
      %p94 = por %p92, %p93
      %p95 = scmp.ne.s32.totalorder %s87, %s89
      %p96 = scmp.eq.s32.totalorder %s23, 1
      %p97 = por %p95, %p96
      %p98 = scmp.ne.s32.totalorder %s89, %s90
      %p99 = scmp.eq.s32.totalorder %s23, 0
      %p100 = por %p98, %p99
      %p101 = scmp.ne.s32.totalorder %s89, %s90
      %p102 = scmp.eq.s32.totalorder %s24, 1
      %p103 = por %p101, %p102
      %p105 = scmp.ne.s32.totalorder %s90, %s104
      %p106 = scmp.eq.s32.totalorder %s24, 0
      %p107 = por %p105, %p106
      %s109 = sadd.s32 %s108, 1
      %p112 = scmp.eq.s32.totalorder %s18, 1
      %p113 = scmp.ne.s32.totalorder %s108, %s110
      %p114 = scmp.eq.s32.totalorder %s18, 0
      %p115 = por %p113, %p114
      %p116 = scmp.ne.s32.totalorder %s108, %s110
      %p117 = scmp.eq.s32.totalorder %s23, 1
      %p118 = por %p116, %p117
      %p119 = scmp.ne.s32.totalorder %s110, %s111
      %p120 = scmp.eq.s32.totalorder %s23, 0
      %p121 = por %p119, %p120
      %p122 = scmp.ne.s32.totalorder %s110, %s111
      %p123 = scmp.eq.s32.totalorder %s24, 1
      %p124 = por %p122, %p123
      %p126 = scmp.ne.s32.totalorder %s111, %s125
      %p127 = scmp.eq.s32.totalorder %s24, 0
      %p128 = por %p126, %p127
      %s130 = sadd.s32 %s129, 1
      %p133 = scmp.eq.s32.totalorder %s18, 1
      %p134 = scmp.ne.s32.totalorder %s129, %s131
      %p135 = scmp.eq.s32.totalorder %s18, 0
      %p136 = por %p134, %p135
      %p137 = scmp.ne.s32.totalorder %s129, %s131
      %p138 = scmp.eq.s32.totalorder %s23, 1
      %p139 = por %p137, %p138
      %p140 = scmp.ne.s32.totalorder %s131, %s132
      %p141 = scmp.eq.s32.totalorder %s23, 0
      %p142 = por %p140, %p141
      %p143 = scmp.ne.s32.totalorder %s131, %s132
      %p144 = scmp.eq.s32.totalorder %s24, 1
      %p145 = por %p143, %p144
      %p147 = scmp.ne.s32.totalorder %s132, %s146
      %p148 = scmp.eq.s32.totalorder %s24, 0
      %p149 = por %p147, %p148
      %s151 = sadd.s32 %s150, 1
      %p154 = scmp.eq.s32.totalorder %s18, 1
      %p155 = scmp.ne.s32.totalorder %s150, %s152
      %p156 = scmp.eq.s32.totalorder %s18, 0
      %p157 = por %p155, %p156
      %p158 = scmp.ne.s32.totalorder %s150, %s152
      %p159 = scmp.eq.s32.totalorder %s23, 1
      %p160 = por %p158, %p159
      %p161 = scmp.ne.s32.totalorder %s152, %s153
      %p162 = scmp.eq.s32.totalorder %s23, 0
      %p163 = por %p161, %p162
      %p164 = scmp.ne.s32.totalorder %s152, %s153
      %p165 = scmp.eq.s32.totalorder %s24, 1
      %p166 = por %p164, %p165
      %p168 = scmp.ne.s32.totalorder %s153, %s167
      %p169 = scmp.eq.s32.totalorder %s24, 0
      %p170 = por %p168, %p169
      %s172 = sadd.s32 %s171, 1
      %p175 = scmp.eq.s32.totalorder %s18, 1
      %p176 = scmp.ne.s32.totalorder %s171, %s173
      %p177 = scmp.eq.s32.totalorder %s18, 0
      %p178 = por %p176, %p177
      %p179 = scmp.ne.s32.totalorder %s171, %s173
      %p180 = scmp.eq.s32.totalorder %s23, 1
      %p181 = por %p179, %p180
      %p182 = scmp.ne.s32.totalorder %s173, %s174
      %p183 = scmp.eq.s32.totalorder %s23, 0
      %p184 = por %p182, %p183
      %p185 = scmp.ne.s32.totalorder %s173, %s174
      %p186 = scmp.eq.s32.totalorder %s24, 1
      %p187 = por %p185, %p186
      %p189 = scmp.ne.s32.totalorder %s174, %s188
      %p190 = scmp.eq.s32.totalorder %s24, 0
      %p191 = por %p189, %p190
      %s192 = ssub.s32 %s25, %s37
      %p193 = scmp.eq.s32.totalorder %s192, 0
      %s195 = sadd.s32 %s194, 1
      %s196 = scalar_select %p193, %s194, %s195
      %p199 = pneg %p193
      %p200 = scmp.eq.s32.totalorder %s18, 1
      %p201 = por %p199, %p200
      %p202 = scmp.ne.s32.totalorder %s194, %s197
      %p203 = scmp.eq.s32.totalorder %s18, 0
      %p204 = por %p202, %p203
      %p205 = scmp.ne.s32.totalorder %s194, %s197
      %p206 = scmp.eq.s32.totalorder %s23, 1
      %p207 = por %p205, %p206
      %p208 = scmp.ne.s32.totalorder %s197, %s198
      %p209 = scmp.eq.s32.totalorder %s23, 0
      %p210 = por %p208, %p209
      %p211 = scmp.ne.s32.totalorder %s197, %s198
      %p212 = scmp.eq.s32.totalorder %s24, 1
      %p213 = por %p211, %p212
      %p215 = scmp.ne.s32.totalorder %s198, %s214
      %p216 = scmp.eq.s32.totalorder %s24, 0
      %p217 = por %p215, %p216
      %p218 = scmp.le.s32.totalorder 1, %s18
      %p219 = scmp.lt.s32.totalorder %s18, 3
      %p220 = pnand %p218, %p219
      %p221 = pneg %p220
      // Predicated region
      $region9: #{tpu_custom_call.1} parent=5 // pred_check
        _
      $region10: #{tpu_custom_call.1} parent=5 // pred_check_branch
        %223 = sbr.rel (%p220) target = $region12
      $region11: #{tpu_custom_call.1} parent=5 // pred_region
        %s224 = ssub.s32 %s18, 1
        // Predicated region
        $region13: #{tpu_custom_call.1} parent=11 // pred_check
          %p225 = pneg %p79
        $region14: #{tpu_custom_call.1} parent=11 // pred_check_branch
          %227 = sbr.rel (%p225) target = $region16
        $region15: #{tpu_custom_call.1} parent=11 // pred_region
          %229 = vsyncadd [#allocation4], 0
          %s230 = sshll.u32 %s1, 4
          %s231 = int_to_ptr.hbm [resolvable:$true] %s230
          %s232 = sshll.u32 [#allocation3], 4
          %s233 = int_to_ptr.vmem [resolvable:$true] %s232
          %238 = dma.hbm_to_vmem [thread:$0]  %s231, 128, %s233, [#allocation4], 64, 64, 4
        $region16: #{tpu_custom_call.1} parent=11 // pred_fallthru
          _
        // Predicated region
        $region17: #{tpu_custom_call.1} parent=11 // pred_check
          %p239 = pneg %p100
        $region18: #{tpu_custom_call.1} parent=11 // pred_check_branch
          %241 = sbr.rel (%p239) target = $region20
        $region19: #{tpu_custom_call.1} parent=11 // pred_region
          _
        $region20: #{tpu_custom_call.1} parent=11 // pred_fallthru
          _
        // Predicated region
        $region21: #{tpu_custom_call.1} parent=11 // pred_check
          %p242 = pneg %p121
        $region22: #{tpu_custom_call.1} parent=11 // pred_check_branch
          %244 = sbr.rel (%p242) target = $region24
        $region23: #{tpu_custom_call.1} parent=11 // pred_region
          %246 = vsyncadd [#allocation7], 0
          %s247 = sshll.u32 %s3, 4
          %s248 = int_to_ptr.hbm [resolvable:$true] %s247
          %s249 = sshll.u32 [#allocation6], 4
          %s250 = int_to_ptr.vmem [resolvable:$true] %s249
          %255 = dma.hbm_to_vmem [thread:$0]  %s248, 256, %s250, [#allocation7], 128, 128, 8
        $region24: #{tpu_custom_call.1} parent=11 // pred_fallthru
          _
        // Predicated region
        $region25: #{tpu_custom_call.1} parent=11 // pred_check
          %p256 = pneg %p142
        $region26: #{tpu_custom_call.1} parent=11 // pred_check_branch
          %258 = sbr.rel (%p256) target = $region28
        $region27: #{tpu_custom_call.1} parent=11 // pred_region
          _
        $region28: #{tpu_custom_call.1} parent=11 // pred_fallthru
          _
        // Predicated region
        $region29: #{tpu_custom_call.1} parent=11 // pred_check
          %p259 = pneg %p163
        $region30: #{tpu_custom_call.1} parent=11 // pred_check_branch
          %261 = sbr.rel (%p259) target = $region32
        $region31: #{tpu_custom_call.1} parent=11 // pred_region
          %263 = vsyncadd [#allocation7], 0
          %s264 = sshll.u32 %s5, 4
          %s265 = int_to_ptr.hbm [resolvable:$true] %s264
          %s266 = sshll.u32 [#allocation8], 4
          %s267 = int_to_ptr.vmem [resolvable:$true] %s266
          %272 = dma.hbm_to_vmem [thread:$0]  %s265, 512, %s267, [#allocation7], 128, 128, 8
        $region32: #{tpu_custom_call.1} parent=11 // pred_fallthru
          _
        // Predicated region
        $region33: #{tpu_custom_call.1} parent=11 // pred_check
          %p273 = pneg %p184
        $region34: #{tpu_custom_call.1} parent=11 // pred_check_branch
          %275 = sbr.rel (%p273) target = $region36
        $region35: #{tpu_custom_call.1} parent=11 // pred_region
          _
        $region36: #{tpu_custom_call.1} parent=11 // pred_fallthru
          _
      $region12: #{tpu_custom_call.1} parent=5 // pred_fallthru
        _
      %p276 = scmp.lt.s32.totalorder %s18, 2
      // Predicated region
      $region37: #{tpu_custom_call.1} parent=5 // pred_check
        %p277 = pneg %p276
      $region38: #{tpu_custom_call.1} parent=5 // pred_check_branch
        %279 = sbr.rel (%p277) target = $region40
      $region39: #{tpu_custom_call.1} parent=5 // pred_region
        // Predicated region
        $region41: #{tpu_custom_call.1} parent=39 // pred_check
          %p280 = pneg %p52
        $region42: #{tpu_custom_call.1} parent=39 // pred_check_branch
          %282 = sbr.rel (%p280) target = $region44
        $region43: #{tpu_custom_call.1} parent=39 // pred_region
          %s283 = smul.u32 2, %s26
          %p284 = scmp.lt.s32.totalorder %s25, 1
          %s285 = scalar_select %p284, %s25, 1
          %p286 = scmp.lt.s32.totalorder %s283, 1
          %s287 = scalar_select %p286, %s283, 1
          %s288 = smul.addr %s287, 2
          %s289 = smul.addr %s285, 4
          %s290 = sadd.s32 %s288, %s289
          %s291 = smul.addr %s290, 2
          %s292 = scalar_lea.vmem %s0, %s291
          %s293 = smul.u32 2, %s26
        $region44: #{tpu_custom_call.1} parent=39 // pred_fallthru
          _
      $region40: #{tpu_custom_call.1} parent=5 // pred_fallthru
        _
      %p294 = scmp.le.s32.totalorder 1, %s18
      %p295 = scmp.lt.s32.totalorder %s18, 3
      %p296 = pnand %p294, %p295
      %p297 = pneg %p296
      // Predicated region
      $region45: #{tpu_custom_call.1} parent=5 // pred_check
        _
      $region46: #{tpu_custom_call.1} parent=5 // pred_check_branch
        %299 = sbr.rel (%p296) target = $region48
      $region47: #{tpu_custom_call.1} parent=5 // pred_region
        %s300 = ssub.s32 %s18, 1
        // Predicated region
        $region49: #{tpu_custom_call.1} parent=47 // pred_check
          %p301 = pneg %p79
        $region50: #{tpu_custom_call.1} parent=47 // pred_check_branch
          %303 = sbr.rel (%p301) target = $region52
        $region51: #{tpu_custom_call.1} parent=47 // pred_region
          %305 = dma.done [#allocation4], 128
        $region52: #{tpu_custom_call.1} parent=47 // pred_fallthru
          _
        // Predicated region
        $region53: #{tpu_custom_call.1} parent=47 // pred_check
          %p306 = pneg %p121
        $region54: #{tpu_custom_call.1} parent=47 // pred_check_branch
          %308 = sbr.rel (%p306) target = $region56
        $region55: #{tpu_custom_call.1} parent=47 // pred_region
          %310 = dma.done [#allocation7], 256
        $region56: #{tpu_custom_call.1} parent=47 // pred_fallthru
          _
        // Predicated region
        $region57: #{tpu_custom_call.1} parent=47 // pred_check
          %p311 = pneg %p163
        $region58: #{tpu_custom_call.1} parent=47 // pred_check_branch
          %313 = sbr.rel (%p311) target = $region60
        $region59: #{tpu_custom_call.1} parent=47 // pred_region
          %315 = dma.done [#allocation7], 512
        $region60: #{tpu_custom_call.1} parent=47 // pred_fallthru
          _
        %s316 = smul.u32 2, %s28
        %p317 = scmp.lt.s32.totalorder %s27, 1
        %s318 = scalar_select %p317, %s27, 1
        %p319 = scmp.lt.s32.totalorder %s316, 1
        %s320 = scalar_select %p319, %s316, 1
        %s321 = smul.addr %s320, 2
        %s322 = smul.addr %s318, 4
        %s323 = sadd.s32 %s321, %s322
        %s324 = smul.addr %s323, 2
        %s325 = scalar_lea.vmem %s0, %s324
        %p326 = pneg %p58
        %p327 = pneg %p55
        %p328 = pneg %p79
        %p329 = pneg %p76
        %p330 = pneg %p100
        %p331 = pneg %p97
        %p332 = pneg %p121
        %p333 = pneg %p118
        %p334 = pneg %p142
        %p335 = pneg %p139
        %p336 = pneg %p163
        %p337 = pneg %p160
        %p338 = pneg %p184
        %p339 = pneg %p181
        %p340 = pneg %p210
        %p341 = pneg %p207
        %s342 = sand.u32 %s197, 1
        %s343 = scalar_lea.sflag [#allocation5], %s342
        %s344 = sand.u32 %s197, 1
        %s345 = scalar_lea.vmem [#allocation9], %s344
        %s346 = smul.u32 2, %s28
        %p347 = scmp.lt.s32.totalorder %s27, 1
        %s348 = scalar_select %p347, %s27, 1
        %p349 = scmp.lt.s32.totalorder %s346, 1
        %s350 = scalar_select %p349, %s346, 1
        %s351 = smul.addr %s350, 2
        %s352 = smul.addr %s348, 4
        %s353 = sadd.s32 %s351, %s352
        %s354 = smul.addr %s353, 2
        %s355 = scalar_lea.vmem %s0, %s354
        %s356 = smul.u32 2, %s28
        %v360 = vld [vmem:[%s355] sm:$0xf]
        %v361 = vld [vmem:[%s355 + $0x4] sm:$0xf]
        %363 = vst [vmem:[#allocation1] ss:$4 sm:$0xff] %v360
        %v364 = vld.sshfl [vmem:[#allocation1] sm:$0xff pattern:$0x73625140]
        %v366 = vld.sshfl [vmem:[#allocation1 + $0x8] sm:$0xff pattern:$0x73625140]
        %s369 = scalar_lea.vmem [#allocation1], 32
        %370 = vst [vmem:[%s369] ss:$4 sm:$0xff] %v361
        %v371 = vld.sshfl [vmem:[#allocation1 + $0x20] sm:$0xff pattern:$0x73625140]
        %v373 = vld.sshfl [vmem:[#allocation1 + $0x28] sm:$0xff pattern:$0x73625140]
        %375 = vrot.lane.b32.xlu0 %v364, 17
        %v376 = vpop.permute.xlu0 %375
        %377 = vrot.lane.b32.xlu0 %v366, 17
        %v378 = vpop.permute.xlu0 %377
        %379 = vrot.lane.b32.xlu0 %v371, 17
        %v380 = vpop.permute.xlu0 %379
        %381 = vrot.lane.b32.xlu0 %v373, 17
        %v382 = vpop.permute.xlu0 %381
        %vm383 = vcmask 138240
        %v384 = vsel %vm383, %v376, %v378
        %v385 = vsel %vm383, %v380, %v382
        %vm388 = vcmask 138240
        %v391 = vsel %vm388, 0, %v376
        %v394 = vsel %vm388, 0, %v380
        %v397 = vsel %vm388, %v378, 0
        %v400 = vsel %vm388, %v382, 0
        %v402 = vlaneseq
        %v403 = vand.u32 %v402, 127
        %v404 = vadd.s32 %v403, 128
        %vm405 = vcmp.lt.s32.totalorder %v403, 0
        %v406 = vsub.s32 0, %v403
        %v407 = vsel %vm405, %v406, %v403
        %v408 = vshrl.u32 %v407, 4
        %v409 = vand.u32 %v407, 15
        %v410 = vsub.s32 0, %v409
        %v411 = vsel %vm405, %v410, %v409
        %vm412 = vcmp.lt.s32.totalorder %v404, 0
        %v413 = vsub.s32 0, %v404
        %v414 = vsel %vm412, %v413, %v404
        %v415 = vshrl.u32 %v414, 4
        %v416 = vand.u32 %v414, 15
        %v417 = vsub.s32 0, %v416
        %v418 = vsel %vm412, %v417, %v416
        %vm419 = vcmp.ne.s32.totalorder %v411, 0
        %vm420 = vcmp.ne.s32.totalorder %v418, 0
        %vm421 = vcmp.lt.s32.totalorder %v411, 0
        %vm422 = vcmp.lt.s32.totalorder %v418, 0
        %vm423 = vmand %vm421, %vm419
        %vm424 = vmand %vm422, %vm420
        %v425 = vadd.s32 %v411, 16
        %v426 = vadd.s32 %v418, 16
        %v427 = vsel %vm423, %v425, %v411
        %v428 = vsel %vm424, %v426, %v418
        %vm429 = vcmp.ne.s32.totalorder %v427, 0
        %vm430 = vcmp.ne.s32.totalorder %v428, 0
        %vm431 = vcmp.ne.s32.totalorder %v427, 15
        %vm432 = vcmp.ne.s32.totalorder %v428, 15
        %v433 = vld [vmem:[#allocation3] sm:$0xf]
        %v434 = vld [vmem:[#allocation3 + $0x4] sm:$0xf]
        %v435 = vld [vmem:[%s2] sm:$0xff]
        %v436 = vld [vmem:[%s2 + $0x8] sm:$0xff]
        %438 = vset.pattern.permute.xlu0 0
        %439 = vperm.xlu0 %438, %v435
        %v440 = vpop.permute.xlu0 %439
        %443 = vset.pattern.permute.xlu0 0
        %444 = vperm.xlu0 %443, %v436
        %v445 = vpop.permute.xlu0 %444
        %v447 = vsel %vm429, 1, 0
        %v448 = vsel %vm430, 1, 0
        %vm449 = vcmp.eq.s32.totalorder %v447, 1
        %vm450 = vcmp.eq.s32.totalorder %v448, 1
        %vm451 = vmpackc.low %vm450, %vm449
        %v452 = vsel %vm451, 65537, 0
        %v453 = vperm.slane %v452, 0
        %v454 = vperm.slane %v452, 4
        %v455 = vunpack.c.l.b16 %v453
        %v456 = vunpack.c.h.b16 %v453
        %v457 = vunpack.c.l.b16 0
        %v458 = vunpack.c.h.b16 0
        %vm459 = vcmp.ne.s32.totalorder %v455, %v457
        %vm460 = vcmp.ne.s32.totalorder %v456, %v458
        %vm461 = vmpackc.low %vm460, %vm459
        %v462 = vunpack.c.l.b16 %v454
        %v463 = vunpack.c.h.b16 %v454
        %v464 = vunpack.c.l.b16 0
        %v465 = vunpack.c.h.b16 0
        %vm466 = vcmp.ne.s32.totalorder %v462, %v464
        %vm467 = vcmp.ne.s32.totalorder %v463, %v465
        %vm468 = vmpackc.low %vm467, %vm466
        %v469 = vsel %vm461, %v391, 0
        %v470 = vsel %vm468, %v384, 0
        %v471 = vsel %vm461, %v394, 0
        %v472 = vsel %vm468, %v385, 0
        %v475 = vunpack.c.l.b16 %v433
        %v476 = vunpack.c.l.b16 %v434
        %v477 = vpack.c.b16 %v476, %v475
        %vm478 = vcmask 31744
        %v480 = vsel %vm478, %v477, 0
        %vm482 = vcmask 1041408
        %v484 = vsel %vm482, %v469, 0
        %v487 = vsel %vm482, %v470, 0
        %489 = vmatpush.bf16.msra.mxu0 0
        %490 = vmatpush.bf16.msra.mxu0 0
        %491 = vmatpush.bf16.msra.mxu0 0
        %492 = vmatpush.bf16.msra.mxu0 0
        %493 = vmatpush.bf16.msra.mxu0 0
        %494 = vmatpush.bf16.msra.mxu0 0
        %495 = vmatpush.bf16.msra.mxu0 0
        %496 = vmatpush.bf16.msra.mxu0 %v484
        %497 = vmatmul.bf16.gmra.mxu0 %v480
        %v498 = vpop.f32.mrf.mxu0
        %v499 = vadd.f32 0.0, %v498
        %v500 = vpop.f32.mrf.mxu0
        %v501 = vadd.f32 0.0, %v500
        %502 = vdwg.mxu0
        %503 = vmatpush.bf16.msra.mxu0 0
        %504 = vmatpush.bf16.msra.mxu0 0
        %505 = vmatpush.bf16.msra.mxu0 0
        %506 = vmatpush.bf16.msra.mxu0 0
        %507 = vmatpush.bf16.msra.mxu0 0
        %508 = vmatpush.bf16.msra.mxu0 0
        %509 = vmatpush.bf16.msra.mxu0 0
        %510 = vmatpush.bf16.msra.mxu0 %v487
        %511 = vmatmul.bf16.gmra.mxu0 %v480
        %v512 = vpop.f32.mrf.mxu0
        %v513 = vadd.f32 0.0, %v512
        %v514 = vpop.f32.mrf.mxu0
        %v515 = vadd.f32 0.0, %v514
        %516 = vdwg.mxu0
        %v518 = vsel %vm482, %v471, 0
        %v521 = vsel %vm482, %v472, 0
        %523 = vmatpush.bf16.msra.mxu0 0
        %524 = vmatpush.bf16.msra.mxu0 0
        %525 = vmatpush.bf16.msra.mxu0 0
        %526 = vmatpush.bf16.msra.mxu0 0
        %527 = vmatpush.bf16.msra.mxu0 0
        %528 = vmatpush.bf16.msra.mxu0 0
        %529 = vmatpush.bf16.msra.mxu0 0
        %530 = vmatpush.bf16.msra.mxu0 %v518
        %531 = vmatmul.bf16.gmra.mxu0 %v480
        %v532 = vpop.f32.mrf.mxu0
        %v533 = vadd.f32 0.0, %v532
        %v534 = vpop.f32.mrf.mxu0
        %v535 = vadd.f32 0.0, %v534
        %536 = vdwg.mxu0
        %537 = vmatpush.bf16.msra.mxu0 0
        %538 = vmatpush.bf16.msra.mxu0 0
        %539 = vmatpush.bf16.msra.mxu0 0
        %540 = vmatpush.bf16.msra.mxu0 0
        %541 = vmatpush.bf16.msra.mxu0 0
        %542 = vmatpush.bf16.msra.mxu0 0
        %543 = vmatpush.bf16.msra.mxu0 0
        %544 = vmatpush.bf16.msra.mxu0 %v521
        %545 = vmatmul.bf16.gmra.mxu0 %v480
        %v546 = vpop.f32.mrf.mxu0
        %v547 = vadd.f32 0.0, %v546
        %v548 = vpop.f32.mrf.mxu0
        %v549 = vadd.f32 0.0, %v548
        %550 = vdwg.mxu0
        %v551 = vadd.f32 %v440, %v499
        %v552 = vadd.f32 %v440, %v513
        %v553 = vadd.f32 %v445, %v501
        %v554 = vadd.f32 %v445, %v515
        %v555 = vadd.f32 %v440, %v533
        %v556 = vadd.f32 %v440, %v547
        %v557 = vadd.f32 %v445, %v535
        %v558 = vadd.f32 %v445, %v549
        %559 = vrot.lane.b32.xlu0 %v477, 124
        %v560 = vpop.permute.xlu0 %559
        %563 = vrot.lane.b32.xlu0 %v391, 127
        %v564 = vpop.permute.xlu0 %563
        %565 = vrot.lane.b32.xlu0 %v384, 127
        %v566 = vpop.permute.xlu0 %565
        %567 = vrot.lane.b32.xlu0 %v397, 127
        %v568 = vpop.permute.xlu0 %567
        %vm569 = vcmask 1039360
        %v570 = vsel %vm569, %v564, %v566
        %v571 = vsel %vm569, %v566, %v568
        %v573 = vsel %vm478, %v560, 0
        %v576 = vsel %vm482, %v570, 0
        %v579 = vsel %vm482, %v571, 0
        %581 = vmatpush.bf16.msra.mxu0 0
        %582 = vmatpush.bf16.msra.mxu0 0
        %583 = vmatpush.bf16.msra.mxu0 0
        %584 = vmatpush.bf16.msra.mxu0 0
        %585 = vmatpush.bf16.msra.mxu0 0
        %586 = vmatpush.bf16.msra.mxu0 0
        %587 = vmatpush.bf16.msra.mxu0 0
        %588 = vmatpush.bf16.msra.mxu0 %v576
        %589 = vmatmul.bf16.gmra.mxu0 %v573
        %v590 = vpop.f32.mrf.mxu0
        %v591 = vadd.f32 0.0, %v590
        %v592 = vpop.f32.mrf.mxu0
        %v593 = vadd.f32 0.0, %v592
        %594 = vdwg.mxu0
        %595 = vmatpush.bf16.msra.mxu0 0
        %596 = vmatpush.bf16.msra.mxu0 0
        %597 = vmatpush.bf16.msra.mxu0 0
        %598 = vmatpush.bf16.msra.mxu0 0
        %599 = vmatpush.bf16.msra.mxu0 0
        %600 = vmatpush.bf16.msra.mxu0 0
        %601 = vmatpush.bf16.msra.mxu0 0
        %602 = vmatpush.bf16.msra.mxu0 %v579
        %603 = vmatmul.bf16.gmra.mxu0 %v573
        %v604 = vpop.f32.mrf.mxu0
        %v605 = vadd.f32 0.0, %v604
        %v606 = vpop.f32.mrf.mxu0
        %v607 = vadd.f32 0.0, %v606
        %608 = vdwg.mxu0
        %611 = vrot.lane.b32.xlu0 %v394, 127
        %v612 = vpop.permute.xlu0 %611
        %613 = vrot.lane.b32.xlu0 %v385, 127
        %v614 = vpop.permute.xlu0 %613
        %615 = vrot.lane.b32.xlu0 %v400, 127
        %v616 = vpop.permute.xlu0 %615
        %v617 = vsel %vm569, %v612, %v614
        %v618 = vsel %vm569, %v614, %v616
        %v620 = vsel %vm482, %v617, 0
        %v623 = vsel %vm482, %v618, 0
        %625 = vmatpush.bf16.msra.mxu0 0
        %626 = vmatpush.bf16.msra.mxu0 0
        %627 = vmatpush.bf16.msra.mxu0 0
        %628 = vmatpush.bf16.msra.mxu0 0
        %629 = vmatpush.bf16.msra.mxu0 0
        %630 = vmatpush.bf16.msra.mxu0 0
        %631 = vmatpush.bf16.msra.mxu0 0
        %632 = vmatpush.bf16.msra.mxu0 %v620
        %633 = vmatmul.bf16.gmra.mxu0 %v573
        %v634 = vpop.f32.mrf.mxu0
        %v635 = vadd.f32 0.0, %v634
        %v636 = vpop.f32.mrf.mxu0
        %v637 = vadd.f32 0.0, %v636
        %638 = vdwg.mxu0
        %639 = vmatpush.bf16.msra.mxu0 0
        %640 = vmatpush.bf16.msra.mxu0 0
        %641 = vmatpush.bf16.msra.mxu0 0
        %642 = vmatpush.bf16.msra.mxu0 0
        %643 = vmatpush.bf16.msra.mxu0 0
        %644 = vmatpush.bf16.msra.mxu0 0
        %645 = vmatpush.bf16.msra.mxu0 0
        %646 = vmatpush.bf16.msra.mxu0 %v623
        %647 = vmatmul.bf16.gmra.mxu0 %v573
        %v648 = vpop.f32.mrf.mxu0
        %v649 = vadd.f32 0.0, %v648
        %v650 = vpop.f32.mrf.mxu0
        %v651 = vadd.f32 0.0, %v650
        %652 = vdwg.mxu0
        %v653 = vadd.f32 %v551, %v591
        %v654 = vadd.f32 %v552, %v605
        %v655 = vadd.f32 %v553, %v593
        %v656 = vadd.f32 %v554, %v607
        %v657 = vadd.f32 %v555, %v635
        %v658 = vadd.f32 %v556, %v649
        %v659 = vadd.f32 %v557, %v637
        %v660 = vadd.f32 %v558, %v651
        %v661 = vsel %vm431, 1, 0
        %v662 = vsel %vm432, 1, 0
        %vm663 = vcmp.eq.s32.totalorder %v661, 1
        %vm664 = vcmp.eq.s32.totalorder %v662, 1
        %vm665 = vmpackc.low %vm664, %vm663
        %v666 = vsel %vm665, 65537, 0
        %v667 = vperm.slane %v666, 0
        %v668 = vperm.slane %v666, 4
        %669 = vrot.lane.b32.xlu0 %v667, 2
        %v670 = vpop.permute.xlu0 %669
        %671 = vrot.lane.b32.xlu0 %v668, 2
        %v672 = vpop.permute.xlu0 %671
        %vm673 = vcmask 15360
        %v674 = vsel %vm673, %v670, %v672
        %v675 = vunpack.c.l.b16 %v670
        %v676 = vunpack.c.h.b16 %v670
        %v677 = vunpack.c.l.b16 0
        %v678 = vunpack.c.h.b16 0
        %vm679 = vcmp.ne.s32.totalorder %v675, %v677
        %vm680 = vcmp.ne.s32.totalorder %v676, %v678
        %vm681 = vmpackc.low %vm680, %vm679
        %v682 = vunpack.c.l.b16 %v674
        %v683 = vunpack.c.h.b16 %v674
        %v684 = vunpack.c.l.b16 0
        %v685 = vunpack.c.h.b16 0
        %vm686 = vcmp.ne.s32.totalorder %v682, %v684
        %vm687 = vcmp.ne.s32.totalorder %v683, %v685
        %vm688 = vmpackc.low %vm687, %vm686
        %v689 = vunpack.c.l.b16 %v672
        %v690 = vunpack.c.h.b16 %v672
        %v691 = vunpack.c.l.b16 0
        %v692 = vunpack.c.h.b16 0
        %vm693 = vcmp.ne.s32.totalorder %v689, %v691
        %vm694 = vcmp.ne.s32.totalorder %v690, %v692
        %vm695 = vmpackc.low %vm694, %vm693
        %v696 = vsel %vm681, %v391, 0
        %v697 = vsel %vm688, %v384, 0
        %v698 = vsel %vm695, %v397, 0
        %v699 = vsel %vm681, %v394, 0
        %v700 = vsel %vm688, %v385, 0
        %v701 = vsel %vm695, %v400, 0
        %702 = vrot.lane.b32.xlu0 %v477, 120
        %v703 = vpop.permute.xlu0 %702
        %707 = vrot.lane.b32.xlu0 %v696, 126
        %v708 = vpop.permute.xlu0 %707
        %709 = vrot.lane.b32.xlu0 %v697, 126
        %v710 = vpop.permute.xlu0 %709
        %711 = vrot.lane.b32.xlu0 %v698, 126
        %v712 = vpop.permute.xlu0 %711
        %vm713 = vcmask 1031168
        %v714 = vsel %vm713, %v708, %v710
        %v715 = vsel %vm713, %v710, %v712
        %v717 = vsel %vm478, %v703, 0
        %v720 = vsel %vm482, %v714, 0
        %v723 = vsel %vm482, %v715, 0
        %725 = vmatpush.bf16.msra.mxu0 0
        %726 = vmatpush.bf16.msra.mxu0 0
        %727 = vmatpush.bf16.msra.mxu0 0
        %728 = vmatpush.bf16.msra.mxu0 0
        %729 = vmatpush.bf16.msra.mxu0 0
        %730 = vmatpush.bf16.msra.mxu0 0
        %731 = vmatpush.bf16.msra.mxu0 0
        %732 = vmatpush.bf16.msra.mxu0 %v720
        %733 = vmatmul.bf16.gmra.mxu0 %v717
        %v734 = vpop.f32.mrf.mxu0
        %v735 = vadd.f32 0.0, %v734
        %v736 = vpop.f32.mrf.mxu0
        %v737 = vadd.f32 0.0, %v736
        %738 = vdwg.mxu0
        %739 = vmatpush.bf16.msra.mxu0 0
        %740 = vmatpush.bf16.msra.mxu0 0
        %741 = vmatpush.bf16.msra.mxu0 0
        %742 = vmatpush.bf16.msra.mxu0 0
        %743 = vmatpush.bf16.msra.mxu0 0
        %744 = vmatpush.bf16.msra.mxu0 0
        %745 = vmatpush.bf16.msra.mxu0 0
        %746 = vmatpush.bf16.msra.mxu0 %v723
        %747 = vmatmul.bf16.gmra.mxu0 %v717
        %v748 = vpop.f32.mrf.mxu0
        %v749 = vadd.f32 0.0, %v748
        %v750 = vpop.f32.mrf.mxu0
        %v751 = vadd.f32 0.0, %v750
        %752 = vdwg.mxu0
        %756 = vrot.lane.b32.xlu0 %v699, 126
        %v757 = vpop.permute.xlu0 %756
        %758 = vrot.lane.b32.xlu0 %v700, 126
        %v759 = vpop.permute.xlu0 %758
        %760 = vrot.lane.b32.xlu0 %v701, 126
        %v761 = vpop.permute.xlu0 %760
        %v762 = vsel %vm713, %v757, %v759
        %v763 = vsel %vm713, %v759, %v761
        %v765 = vsel %vm482, %v762, 0
        %v768 = vsel %vm482, %v763, 0
        %770 = vmatpush.bf16.msra.mxu0 0
        %771 = vmatpush.bf16.msra.mxu0 0
        %772 = vmatpush.bf16.msra.mxu0 0
        %773 = vmatpush.bf16.msra.mxu0 0
        %774 = vmatpush.bf16.msra.mxu0 0
        %775 = vmatpush.bf16.msra.mxu0 0
        %776 = vmatpush.bf16.msra.mxu0 0
        %777 = vmatpush.bf16.msra.mxu0 %v765
        %778 = vmatmul.bf16.gmra.mxu0 %v717
        %v779 = vpop.f32.mrf.mxu0
        %v780 = vadd.f32 0.0, %v779
        %v781 = vpop.f32.mrf.mxu0
        %v782 = vadd.f32 0.0, %v781
        %783 = vdwg.mxu0
        %784 = vmatpush.bf16.msra.mxu0 0
        %785 = vmatpush.bf16.msra.mxu0 0
        %786 = vmatpush.bf16.msra.mxu0 0
        %787 = vmatpush.bf16.msra.mxu0 0
        %788 = vmatpush.bf16.msra.mxu0 0
        %789 = vmatpush.bf16.msra.mxu0 0
        %790 = vmatpush.bf16.msra.mxu0 0
        %791 = vmatpush.bf16.msra.mxu0 %v768
        %792 = vmatmul.bf16.gmra.mxu0 %v717
        %v793 = vpop.f32.mrf.mxu0
        %v794 = vadd.f32 0.0, %v793
        %v795 = vpop.f32.mrf.mxu0
        %v796 = vadd.f32 0.0, %v795
        %797 = vdwg.mxu0
        %v798 = vadd.f32 %v653, %v735
        %v799 = vadd.f32 %v654, %v749
        %v800 = vadd.f32 %v655, %v737
        %v801 = vadd.f32 %v656, %v751
        %v802 = vadd.f32 %v657, %v780
        %v803 = vadd.f32 %v658, %v794
        %v804 = vadd.f32 %v659, %v782
        %v805 = vadd.f32 %v660, %v796
        %806 = vrot.lane.b32.xlu0 %v453, 16
        %v807 = vpop.permute.xlu0 %806
        %808 = vrot.lane.b32.xlu0 %v454, 16
        %v809 = vpop.permute.xlu0 %808
        %vm810 = vcmask 130048
        %v811 = vsel %vm810, %v807, %v809
        %v812 = vunpack.c.l.b16 %v807
        %v813 = vunpack.c.h.b16 %v807
        %v814 = vunpack.c.l.b16 0
        %v815 = vunpack.c.h.b16 0
        %vm816 = vcmp.ne.s32.totalorder %v812, %v814
        %vm817 = vcmp.ne.s32.totalorder %v813, %v815
        %vm818 = vmpackc.low %vm817, %vm816
        %v819 = vunpack.c.l.b16 %v811
        %v820 = vunpack.c.h.b16 %v811
        %v821 = vunpack.c.l.b16 0
        %v822 = vunpack.c.h.b16 0
        %vm823 = vcmp.ne.s32.totalorder %v819, %v821
        %vm824 = vcmp.ne.s32.totalorder %v820, %v822
        %vm825 = vmpackc.low %vm824, %vm823
        %v826 = vunpack.c.l.b16 %v809
        %v827 = vunpack.c.h.b16 %v809
        %v828 = vunpack.c.l.b16 0
        %v829 = vunpack.c.h.b16 0
        %vm830 = vcmp.ne.s32.totalorder %v826, %v828
        %vm831 = vcmp.ne.s32.totalorder %v827, %v829
        %vm832 = vmpackc.low %vm831, %vm830
        %v833 = vsel %vm818, %v391, 0
        %v834 = vsel %vm825, %v384, 0
        %v835 = vsel %vm832, %v397, 0
        %v836 = vsel %vm818, %v394, 0
        %v837 = vsel %vm825, %v385, 0
        %v838 = vsel %vm832, %v400, 0
        %839 = vrot.lane.b32.xlu0 %v477, 116
        %v840 = vpop.permute.xlu0 %839
        %844 = vrot.lane.b32.xlu0 %v833, 112
        %v845 = vpop.permute.xlu0 %844
        %846 = vrot.lane.b32.xlu0 %v834, 112
        %v847 = vpop.permute.xlu0 %846
        %848 = vrot.lane.b32.xlu0 %v835, 112
        %v849 = vpop.permute.xlu0 %848
        %vm850 = vcmask 916480
        %v851 = vsel %vm850, %v845, %v847
        %v852 = vsel %vm850, %v847, %v849
        %v854 = vsel %vm478, %v840, 0
        %v857 = vsel %vm482, %v851, 0
        %v860 = vsel %vm482, %v852, 0
        %862 = vmatpush.bf16.msra.mxu0 0
        %863 = vmatpush.bf16.msra.mxu0 0
        %864 = vmatpush.bf16.msra.mxu0 0
        %865 = vmatpush.bf16.msra.mxu0 0
        %866 = vmatpush.bf16.msra.mxu0 0
        %867 = vmatpush.bf16.msra.mxu0 0
        %868 = vmatpush.bf16.msra.mxu0 0
        %869 = vmatpush.bf16.msra.mxu0 %v857
        %870 = vmatmul.bf16.gmra.mxu0 %v854
        %v871 = vpop.f32.mrf.mxu0
        %v872 = vadd.f32 0.0, %v871
        %v873 = vpop.f32.mrf.mxu0
        %v874 = vadd.f32 0.0, %v873
        %875 = vdwg.mxu0
        %876 = vmatpush.bf16.msra.mxu0 0
        %877 = vmatpush.bf16.msra.mxu0 0
        %878 = vmatpush.bf16.msra.mxu0 0
        %879 = vmatpush.bf16.msra.mxu0 0
        %880 = vmatpush.bf16.msra.mxu0 0
        %881 = vmatpush.bf16.msra.mxu0 0
        %882 = vmatpush.bf16.msra.mxu0 0
        %883 = vmatpush.bf16.msra.mxu0 %v860
        %884 = vmatmul.bf16.gmra.mxu0 %v854
        %v885 = vpop.f32.mrf.mxu0
        %v886 = vadd.f32 0.0, %v885
        %v887 = vpop.f32.mrf.mxu0
        %v888 = vadd.f32 0.0, %v887
        %889 = vdwg.mxu0
        %893 = vrot.lane.b32.xlu0 %v836, 112
        %v894 = vpop.permute.xlu0 %893
        %895 = vrot.lane.b32.xlu0 %v837, 112
        %v896 = vpop.permute.xlu0 %895
        %897 = vrot.lane.b32.xlu0 %v838, 112
        %v898 = vpop.permute.xlu0 %897
        %v899 = vsel %vm850, %v894, %v896
        %v900 = vsel %vm850, %v896, %v898
        %v902 = vsel %vm482, %v899, 0
        %v905 = vsel %vm482, %v900, 0
        %907 = vmatpush.bf16.msra.mxu0 0
        %908 = vmatpush.bf16.msra.mxu0 0
        %909 = vmatpush.bf16.msra.mxu0 0
        %910 = vmatpush.bf16.msra.mxu0 0
        %911 = vmatpush.bf16.msra.mxu0 0
        %912 = vmatpush.bf16.msra.mxu0 0
        %913 = vmatpush.bf16.msra.mxu0 0
        %914 = vmatpush.bf16.msra.mxu0 %v902
        %915 = vmatmul.bf16.gmra.mxu0 %v854
        %v916 = vpop.f32.mrf.mxu0
        %v917 = vadd.f32 0.0, %v916
        %v918 = vpop.f32.mrf.mxu0
        %v919 = vadd.f32 0.0, %v918
        %920 = vdwg.mxu0
        %921 = vmatpush.bf16.msra.mxu0 0
        %922 = vmatpush.bf16.msra.mxu0 0
        %923 = vmatpush.bf16.msra.mxu0 0
        %924 = vmatpush.bf16.msra.mxu0 0
        %925 = vmatpush.bf16.msra.mxu0 0
        %926 = vmatpush.bf16.msra.mxu0 0
        %927 = vmatpush.bf16.msra.mxu0 0
        %928 = vmatpush.bf16.msra.mxu0 %v905
        %929 = vmatmul.bf16.gmra.mxu0 %v854
        %v930 = vpop.f32.mrf.mxu0
        %v931 = vadd.f32 0.0, %v930
        %v932 = vpop.f32.mrf.mxu0
        %v933 = vadd.f32 0.0, %v932
        %934 = vdwg.mxu0
        %v935 = vadd.f32 %v798, %v872
        %v936 = vadd.f32 %v799, %v886
        %v937 = vadd.f32 %v800, %v874
        %v938 = vadd.f32 %v801, %v888
        %v939 = vadd.f32 %v802, %v917
        %v940 = vadd.f32 %v803, %v931
        %v941 = vadd.f32 %v804, %v919
        %v942 = vadd.f32 %v805, %v933
        %943 = vrot.lane.b32.xlu0 %v477, 112
        %v944 = vpop.permute.xlu0 %943
        %945 = vrot.lane.b32.xlu0 %v391, 111
        %v946 = vpop.permute.xlu0 %945
        %947 = vrot.lane.b32.xlu0 %v384, 111
        %v948 = vpop.permute.xlu0 %947
        %949 = vrot.lane.b32.xlu0 %v397, 111
        %v950 = vpop.permute.xlu0 %949
        %vm951 = vcmask 908288
        %v952 = vsel %vm951, %v946, %v948
        %v953 = vsel %vm951, %v948, %v950
        %v955 = vsel %vm478, %v944, 0
        %v958 = vsel %vm482, %v952, 0
        %v961 = vsel %vm482, %v953, 0
        %963 = vmatpush.bf16.msra.mxu0 0
        %964 = vmatpush.bf16.msra.mxu0 0
        %965 = vmatpush.bf16.msra.mxu0 0
        %966 = vmatpush.bf16.msra.mxu0 0
        %967 = vmatpush.bf16.msra.mxu0 0
        %968 = vmatpush.bf16.msra.mxu0 0
        %969 = vmatpush.bf16.msra.mxu0 0
        %970 = vmatpush.bf16.msra.mxu0 %v958
        %971 = vmatmul.bf16.gmra.mxu0 %v955
        %v972 = vpop.f32.mrf.mxu0
        %v973 = vadd.f32 0.0, %v972
        %v974 = vpop.f32.mrf.mxu0
        %v975 = vadd.f32 0.0, %v974
        %976 = vdwg.mxu0
        %977 = vmatpush.bf16.msra.mxu0 0
        %978 = vmatpush.bf16.msra.mxu0 0
        %979 = vmatpush.bf16.msra.mxu0 0
        %980 = vmatpush.bf16.msra.mxu0 0
        %981 = vmatpush.bf16.msra.mxu0 0
        %982 = vmatpush.bf16.msra.mxu0 0
        %983 = vmatpush.bf16.msra.mxu0 0
        %984 = vmatpush.bf16.msra.mxu0 %v961
        %985 = vmatmul.bf16.gmra.mxu0 %v955
        %v986 = vpop.f32.mrf.mxu0
        %v987 = vadd.f32 0.0, %v986
        %v988 = vpop.f32.mrf.mxu0
        %v989 = vadd.f32 0.0, %v988
        %990 = vdwg.mxu0
        %991 = vrot.lane.b32.xlu0 %v394, 111
        %v992 = vpop.permute.xlu0 %991
        %993 = vrot.lane.b32.xlu0 %v385, 111
        %v994 = vpop.permute.xlu0 %993
        %995 = vrot.lane.b32.xlu0 %v400, 111
        %v996 = vpop.permute.xlu0 %995
        %v997 = vsel %vm951, %v992, %v994
        %v998 = vsel %vm951, %v994, %v996
        %v1000 = vsel %vm482, %v997, 0
        %v1003 = vsel %vm482, %v998, 0
        %1005 = vmatpush.bf16.msra.mxu0 0
        %1006 = vmatpush.bf16.msra.mxu0 0
        %1007 = vmatpush.bf16.msra.mxu0 0
        %1008 = vmatpush.bf16.msra.mxu0 0
        %1009 = vmatpush.bf16.msra.mxu0 0
        %1010 = vmatpush.bf16.msra.mxu0 0
        %1011 = vmatpush.bf16.msra.mxu0 0
        %1012 = vmatpush.bf16.msra.mxu0 %v1000
        %1013 = vmatmul.bf16.gmra.mxu0 %v955
        %v1014 = vpop.f32.mrf.mxu0
        %v1015 = vadd.f32 0.0, %v1014
        %v1016 = vpop.f32.mrf.mxu0
        %v1017 = vadd.f32 0.0, %v1016
        %1018 = vdwg.mxu0
        %1019 = vmatpush.bf16.msra.mxu0 0
        %1020 = vmatpush.bf16.msra.mxu0 0
        %1021 = vmatpush.bf16.msra.mxu0 0
        %1022 = vmatpush.bf16.msra.mxu0 0
        %1023 = vmatpush.bf16.msra.mxu0 0
        %1024 = vmatpush.bf16.msra.mxu0 0
        %1025 = vmatpush.bf16.msra.mxu0 0
        %1026 = vmatpush.bf16.msra.mxu0 %v1003
        %1027 = vmatmul.bf16.gmra.mxu0 %v955
        %v1028 = vpop.f32.mrf.mxu0
        %v1029 = vadd.f32 0.0, %v1028
        %v1030 = vpop.f32.mrf.mxu0
        %v1031 = vadd.f32 0.0, %v1030
        %1032 = vdwg.mxu0
        %v1033 = vadd.f32 %v935, %v973
        %v1034 = vadd.f32 %v936, %v987
        %v1035 = vadd.f32 %v937, %v975
        %v1036 = vadd.f32 %v938, %v989
        %v1037 = vadd.f32 %v939, %v1015
        %v1038 = vadd.f32 %v940, %v1029
        %v1039 = vadd.f32 %v941, %v1017
        %v1040 = vadd.f32 %v942, %v1031
        %1041 = vrot.lane.b32.xlu0 %v667, 18
        %v1042 = vpop.permute.xlu0 %1041
        %1043 = vrot.lane.b32.xlu0 %v668, 18
        %v1044 = vpop.permute.xlu0 %1043
        %vm1045 = vcmask 146432
        %v1046 = vsel %vm1045, %v1042, %v1044
        %v1047 = vunpack.c.l.b16 %v1042
        %v1048 = vunpack.c.h.b16 %v1042
        %v1049 = vunpack.c.l.b16 0
        %v1050 = vunpack.c.h.b16 0
        %vm1051 = vcmp.ne.s32.totalorder %v1047, %v1049
        %vm1052 = vcmp.ne.s32.totalorder %v1048, %v1050
        %vm1053 = vmpackc.low %vm1052, %vm1051
        %v1054 = vunpack.c.l.b16 %v1046
        %v1055 = vunpack.c.h.b16 %v1046
        %v1056 = vunpack.c.l.b16 0
        %v1057 = vunpack.c.h.b16 0
        %vm1058 = vcmp.ne.s32.totalorder %v1054, %v1056
        %vm1059 = vcmp.ne.s32.totalorder %v1055, %v1057
        %vm1060 = vmpackc.low %vm1059, %vm1058
        %v1061 = vunpack.c.l.b16 %v1044
        %v1062 = vunpack.c.h.b16 %v1044
        %v1063 = vunpack.c.l.b16 0
        %v1064 = vunpack.c.h.b16 0
        %vm1065 = vcmp.ne.s32.totalorder %v1061, %v1063
        %vm1066 = vcmp.ne.s32.totalorder %v1062, %v1064
        %vm1067 = vmpackc.low %vm1066, %vm1065
        %v1068 = vsel %vm1053, %v391, 0
        %v1069 = vsel %vm1060, %v384, 0
        %v1070 = vsel %vm1067, %v397, 0
        %v1071 = vsel %vm1053, %v394, 0
        %v1072 = vsel %vm1060, %v385, 0
        %v1073 = vsel %vm1067, %v400, 0
        %1074 = vrot.lane.b32.xlu0 %v477, 108
        %v1075 = vpop.permute.xlu0 %1074
        %1079 = vrot.lane.b32.xlu0 %v1068, 110
        %v1080 = vpop.permute.xlu0 %1079
        %1081 = vrot.lane.b32.xlu0 %v1069, 110
        %v1082 = vpop.permute.xlu0 %1081
        %1083 = vrot.lane.b32.xlu0 %v1070, 110
        %v1084 = vpop.permute.xlu0 %1083
        %vm1085 = vcmask 900096
        %v1086 = vsel %vm1085, %v1080, %v1082
        %v1087 = vsel %vm1085, %v1082, %v1084
        %v1089 = vsel %vm478, %v1075, 0
        %v1092 = vsel %vm482, %v1086, 0
        %v1095 = vsel %vm482, %v1087, 0
        %1097 = vmatpush.bf16.msra.mxu0 0
        %1098 = vmatpush.bf16.msra.mxu0 0
        %1099 = vmatpush.bf16.msra.mxu0 0
        %1100 = vmatpush.bf16.msra.mxu0 0
        %1101 = vmatpush.bf16.msra.mxu0 0
        %1102 = vmatpush.bf16.msra.mxu0 0
        %1103 = vmatpush.bf16.msra.mxu0 0
        %1104 = vmatpush.bf16.msra.mxu0 %v1092
        %1105 = vmatmul.bf16.gmra.mxu0 %v1089
        %v1106 = vpop.f32.mrf.mxu0
        %v1107 = vadd.f32 0.0, %v1106
        %v1108 = vpop.f32.mrf.mxu0
        %v1109 = vadd.f32 0.0, %v1108
        %1110 = vdwg.mxu0
        %1111 = vmatpush.bf16.msra.mxu0 0
        %1112 = vmatpush.bf16.msra.mxu0 0
        %1113 = vmatpush.bf16.msra.mxu0 0
        %1114 = vmatpush.bf16.msra.mxu0 0
        %1115 = vmatpush.bf16.msra.mxu0 0
        %1116 = vmatpush.bf16.msra.mxu0 0
        %1117 = vmatpush.bf16.msra.mxu0 0
        %1118 = vmatpush.bf16.msra.mxu0 %v1095
        %1119 = vmatmul.bf16.gmra.mxu0 %v1089
        %v1120 = vpop.f32.mrf.mxu0
        %v1121 = vadd.f32 0.0, %v1120
        %v1122 = vpop.f32.mrf.mxu0
        %v1123 = vadd.f32 0.0, %v1122
        %1124 = vdwg.mxu0
        %1128 = vrot.lane.b32.xlu0 %v1071, 110
        %v1129 = vpop.permute.xlu0 %1128
        %1130 = vrot.lane.b32.xlu0 %v1072, 110
        %v1131 = vpop.permute.xlu0 %1130
        %1132 = vrot.lane.b32.xlu0 %v1073, 110
        %v1133 = vpop.permute.xlu0 %1132
        %v1134 = vsel %vm1085, %v1129, %v1131
        %v1135 = vsel %vm1085, %v1131, %v1133
        %v1137 = vsel %vm482, %v1134, 0
        %v1140 = vsel %vm482, %v1135, 0
        %1142 = vmatpush.bf16.msra.mxu0 0
        %1143 = vmatpush.bf16.msra.mxu0 0
        %1144 = vmatpush.bf16.msra.mxu0 0
        %1145 = vmatpush.bf16.msra.mxu0 0
        %1146 = vmatpush.bf16.msra.mxu0 0
        %1147 = vmatpush.bf16.msra.mxu0 0
        %1148 = vmatpush.bf16.msra.mxu0 0
        %1149 = vmatpush.bf16.msra.mxu0 %v1137
        %1150 = vmatmul.bf16.gmra.mxu0 %v1089
        %v1151 = vpop.f32.mrf.mxu0
        %v1152 = vadd.f32 0.0, %v1151
        %v1153 = vpop.f32.mrf.mxu0
        %v1154 = vadd.f32 0.0, %v1153
        %1155 = vdwg.mxu0
        %1156 = vmatpush.bf16.msra.mxu0 0
        %1157 = vmatpush.bf16.msra.mxu0 0
        %1158 = vmatpush.bf16.msra.mxu0 0
        %1159 = vmatpush.bf16.msra.mxu0 0
        %1160 = vmatpush.bf16.msra.mxu0 0
        %1161 = vmatpush.bf16.msra.mxu0 0
        %1162 = vmatpush.bf16.msra.mxu0 0
        %1163 = vmatpush.bf16.msra.mxu0 %v1140
        %1164 = vmatmul.bf16.gmra.mxu0 %v1089
        %v1165 = vpop.f32.mrf.mxu0
        %v1166 = vadd.f32 0.0, %v1165
        %v1167 = vpop.f32.mrf.mxu0
        %v1168 = vadd.f32 0.0, %v1167
        %1169 = vdwg.mxu0
        %v1170 = vadd.f32 %v1033, %v1107
        %v1171 = vadd.f32 %v1034, %v1121
        %v1172 = vadd.f32 %v1035, %v1109
        %v1173 = vadd.f32 %v1036, %v1123
        %v1174 = vadd.f32 %v1037, %v1152
        %v1175 = vadd.f32 %v1038, %v1166
        %v1176 = vadd.f32 %v1039, %v1154
        %v1177 = vadd.f32 %v1040, %v1168
        %1178 = vrot.lane.b32.xlu0 %v453, 32
        %v1179 = vpop.permute.xlu0 %1178
        %1180 = vrot.lane.b32.xlu0 %v454, 32
        %v1181 = vpop.permute.xlu0 %1180
        %vm1182 = vcmask 261120
        %v1183 = vsel %vm1182, %v1179, %v1181
        %v1184 = vunpack.c.l.b16 %v1179
        %v1185 = vunpack.c.h.b16 %v1179
        %v1186 = vunpack.c.l.b16 0
        %v1187 = vunpack.c.h.b16 0
        %vm1188 = vcmp.ne.s32.totalorder %v1184, %v1186
        %vm1189 = vcmp.ne.s32.totalorder %v1185, %v1187
        %vm1190 = vmpackc.low %vm1189, %vm1188
        %v1191 = vunpack.c.l.b16 %v1183
        %v1192 = vunpack.c.h.b16 %v1183
        %v1193 = vunpack.c.l.b16 0
        %v1194 = vunpack.c.h.b16 0
        %vm1195 = vcmp.ne.s32.totalorder %v1191, %v1193
        %vm1196 = vcmp.ne.s32.totalorder %v1192, %v1194
        %vm1197 = vmpackc.low %vm1196, %vm1195
        %v1198 = vunpack.c.l.b16 %v1181
        %v1199 = vunpack.c.h.b16 %v1181
        %v1200 = vunpack.c.l.b16 0
        %v1201 = vunpack.c.h.b16 0
        %vm1202 = vcmp.ne.s32.totalorder %v1198, %v1200
        %vm1203 = vcmp.ne.s32.totalorder %v1199, %v1201
        %vm1204 = vmpackc.low %vm1203, %vm1202
        %v1205 = vsel %vm1190, %v391, 0
        %v1206 = vsel %vm1197, %v384, 0
        %v1207 = vsel %vm1204, %v397, 0
        %v1208 = vsel %vm1190, %v394, 0
        %v1209 = vsel %vm1197, %v385, 0
        %v1210 = vsel %vm1204, %v400, 0
        %1211 = vrot.lane.b32.xlu0 %v477, 104
        %v1212 = vpop.permute.xlu0 %1211
        %1216 = vrot.lane.b32.xlu0 %v1205, 96
        %v1217 = vpop.permute.xlu0 %1216
        %1218 = vrot.lane.b32.xlu0 %v1206, 96
        %v1219 = vpop.permute.xlu0 %1218
        %1220 = vrot.lane.b32.xlu0 %v1207, 96
        %v1221 = vpop.permute.xlu0 %1220
        %vm1222 = vcmask 785408
        %v1223 = vsel %vm1222, %v1217, %v1219
        %v1224 = vsel %vm1222, %v1219, %v1221
        %v1226 = vsel %vm478, %v1212, 0
        %v1229 = vsel %vm482, %v1223, 0
        %v1232 = vsel %vm482, %v1224, 0
        %1234 = vmatpush.bf16.msra.mxu0 0
        %1235 = vmatpush.bf16.msra.mxu0 0
        %1236 = vmatpush.bf16.msra.mxu0 0
        %1237 = vmatpush.bf16.msra.mxu0 0
        %1238 = vmatpush.bf16.msra.mxu0 0
        %1239 = vmatpush.bf16.msra.mxu0 0
        %1240 = vmatpush.bf16.msra.mxu0 0
        %1241 = vmatpush.bf16.msra.mxu0 %v1229
        %1242 = vmatmul.bf16.gmra.mxu0 %v1226
        %v1243 = vpop.f32.mrf.mxu0
        %v1244 = vadd.f32 0.0, %v1243
        %v1245 = vpop.f32.mrf.mxu0
        %v1246 = vadd.f32 0.0, %v1245
        %1247 = vdwg.mxu0
        %1248 = vmatpush.bf16.msra.mxu0 0
        %1249 = vmatpush.bf16.msra.mxu0 0
        %1250 = vmatpush.bf16.msra.mxu0 0
        %1251 = vmatpush.bf16.msra.mxu0 0
        %1252 = vmatpush.bf16.msra.mxu0 0
        %1253 = vmatpush.bf16.msra.mxu0 0
        %1254 = vmatpush.bf16.msra.mxu0 0
        %1255 = vmatpush.bf16.msra.mxu0 %v1232
        %1256 = vmatmul.bf16.gmra.mxu0 %v1226
        %v1257 = vpop.f32.mrf.mxu0
        %v1258 = vadd.f32 0.0, %v1257
        %v1259 = vpop.f32.mrf.mxu0
        %v1260 = vadd.f32 0.0, %v1259
        %1261 = vdwg.mxu0
        %1265 = vrot.lane.b32.xlu0 %v1208, 96
        %v1266 = vpop.permute.xlu0 %1265
        %1267 = vrot.lane.b32.xlu0 %v1209, 96
        %v1268 = vpop.permute.xlu0 %1267
        %1269 = vrot.lane.b32.xlu0 %v1210, 96
        %v1270 = vpop.permute.xlu0 %1269
        %v1271 = vsel %vm1222, %v1266, %v1268
        %v1272 = vsel %vm1222, %v1268, %v1270
        %v1274 = vsel %vm482, %v1271, 0
        %v1277 = vsel %vm482, %v1272, 0
        %1279 = vmatpush.bf16.msra.mxu0 0
        %1280 = vmatpush.bf16.msra.mxu0 0
        %1281 = vmatpush.bf16.msra.mxu0 0
        %1282 = vmatpush.bf16.msra.mxu0 0
        %1283 = vmatpush.bf16.msra.mxu0 0
        %1284 = vmatpush.bf16.msra.mxu0 0
        %1285 = vmatpush.bf16.msra.mxu0 0
        %1286 = vmatpush.bf16.msra.mxu0 %v1274
        %1287 = vmatmul.bf16.gmra.mxu0 %v1226
        %v1288 = vpop.f32.mrf.mxu0
        %v1289 = vadd.f32 0.0, %v1288
        %v1290 = vpop.f32.mrf.mxu0
        %v1291 = vadd.f32 0.0, %v1290
        %1292 = vdwg.mxu0
        %1293 = vmatpush.bf16.msra.mxu0 0
        %1294 = vmatpush.bf16.msra.mxu0 0
        %1295 = vmatpush.bf16.msra.mxu0 0
        %1296 = vmatpush.bf16.msra.mxu0 0
        %1297 = vmatpush.bf16.msra.mxu0 0
        %1298 = vmatpush.bf16.msra.mxu0 0
        %1299 = vmatpush.bf16.msra.mxu0 0
        %1300 = vmatpush.bf16.msra.mxu0 %v1277
        %1301 = vmatmul.bf16.gmra.mxu0 %v1226
        %v1302 = vpop.f32.mrf.mxu0
        %v1303 = vadd.f32 0.0, %v1302
        %v1304 = vpop.f32.mrf.mxu0
        %v1305 = vadd.f32 0.0, %v1304
        %1306 = vdwg.mxu0
        %v1307 = vadd.f32 %v1170, %v1244
        %v1308 = vadd.f32 %v1171, %v1258
        %v1309 = vadd.f32 %v1172, %v1246
        %v1310 = vadd.f32 %v1173, %v1260
        %v1311 = vadd.f32 %v1174, %v1289
        %v1312 = vadd.f32 %v1175, %v1303
        %v1313 = vadd.f32 %v1176, %v1291
        %v1314 = vadd.f32 %v1177, %v1305
        %1315 = vrot.lane.b32.xlu0 %v477, 100
        %v1316 = vpop.permute.xlu0 %1315
        %1317 = vrot.lane.b32.xlu0 %v391, 95
        %v1318 = vpop.permute.xlu0 %1317
        %1319 = vrot.lane.b32.xlu0 %v384, 95
        %v1320 = vpop.permute.xlu0 %1319
        %1321 = vrot.lane.b32.xlu0 %v397, 95
        %v1322 = vpop.permute.xlu0 %1321
        %vm1323 = vcmask 777216
        %v1324 = vsel %vm1323, %v1318, %v1320
        %v1325 = vsel %vm1323, %v1320, %v1322
        %v1327 = vsel %vm478, %v1316, 0
        %v1330 = vsel %vm482, %v1324, 0
        %v1333 = vsel %vm482, %v1325, 0
        %1335 = vmatpush.bf16.msra.mxu0 0
        %1336 = vmatpush.bf16.msra.mxu0 0
        %1337 = vmatpush.bf16.msra.mxu0 0
        %1338 = vmatpush.bf16.msra.mxu0 0
        %1339 = vmatpush.bf16.msra.mxu0 0
        %1340 = vmatpush.bf16.msra.mxu0 0
        %1341 = vmatpush.bf16.msra.mxu0 0
        %1342 = vmatpush.bf16.msra.mxu0 %v1330
        %1343 = vmatmul.bf16.gmra.mxu0 %v1327
        %v1344 = vpop.f32.mrf.mxu0
        %v1345 = vadd.f32 0.0, %v1344
        %v1346 = vpop.f32.mrf.mxu0
        %v1347 = vadd.f32 0.0, %v1346
        %1348 = vdwg.mxu0
        %1349 = vmatpush.bf16.msra.mxu0 0
        %1350 = vmatpush.bf16.msra.mxu0 0
        %1351 = vmatpush.bf16.msra.mxu0 0
        %1352 = vmatpush.bf16.msra.mxu0 0
        %1353 = vmatpush.bf16.msra.mxu0 0
        %1354 = vmatpush.bf16.msra.mxu0 0
        %1355 = vmatpush.bf16.msra.mxu0 0
        %1356 = vmatpush.bf16.msra.mxu0 %v1333
        %1357 = vmatmul.bf16.gmra.mxu0 %v1327
        %v1358 = vpop.f32.mrf.mxu0
        %v1359 = vadd.f32 0.0, %v1358
        %v1360 = vpop.f32.mrf.mxu0
        %v1361 = vadd.f32 0.0, %v1360
        %1362 = vdwg.mxu0
        %1363 = vrot.lane.b32.xlu0 %v394, 95
        %v1364 = vpop.permute.xlu0 %1363
        %1365 = vrot.lane.b32.xlu0 %v385, 95
        %v1366 = vpop.permute.xlu0 %1365
        %1367 = vrot.lane.b32.xlu0 %v400, 95
        %v1368 = vpop.permute.xlu0 %1367
        %v1369 = vsel %vm1323, %v1364, %v1366
        %v1370 = vsel %vm1323, %v1366, %v1368
        %v1372 = vsel %vm482, %v1369, 0
        %v1375 = vsel %vm482, %v1370, 0
        %1377 = vmatpush.bf16.msra.mxu0 0
        %1378 = vmatpush.bf16.msra.mxu0 0
        %1379 = vmatpush.bf16.msra.mxu0 0
        %1380 = vmatpush.bf16.msra.mxu0 0
        %1381 = vmatpush.bf16.msra.mxu0 0
        %1382 = vmatpush.bf16.msra.mxu0 0
        %1383 = vmatpush.bf16.msra.mxu0 0
        %1384 = vmatpush.bf16.msra.mxu0 %v1372
        %1385 = vmatmul.bf16.gmra.mxu0 %v1327
        %v1386 = vpop.f32.mrf.mxu0
        %v1387 = vadd.f32 0.0, %v1386
        %v1388 = vpop.f32.mrf.mxu0
        %v1389 = vadd.f32 0.0, %v1388
        %1390 = vdwg.mxu0
        %1391 = vmatpush.bf16.msra.mxu0 0
        %1392 = vmatpush.bf16.msra.mxu0 0
        %1393 = vmatpush.bf16.msra.mxu0 0
        %1394 = vmatpush.bf16.msra.mxu0 0
        %1395 = vmatpush.bf16.msra.mxu0 0
        %1396 = vmatpush.bf16.msra.mxu0 0
        %1397 = vmatpush.bf16.msra.mxu0 0
        %1398 = vmatpush.bf16.msra.mxu0 %v1375
        %1399 = vmatmul.bf16.gmra.mxu0 %v1327
        %v1400 = vpop.f32.mrf.mxu0
        %v1401 = vadd.f32 0.0, %v1400
        %v1402 = vpop.f32.mrf.mxu0
        %v1403 = vadd.f32 0.0, %v1402
        %1404 = vdwg.mxu0
        %v1405 = vadd.f32 %v1307, %v1345
        %v1406 = vadd.f32 %v1308, %v1359
        %v1407 = vadd.f32 %v1309, %v1347
        %v1408 = vadd.f32 %v1310, %v1361
        %v1409 = vadd.f32 %v1311, %v1387
        %v1410 = vadd.f32 %v1312, %v1401
        %v1411 = vadd.f32 %v1313, %v1389
        %v1412 = vadd.f32 %v1314, %v1403
        %1413 = vrot.lane.b32.xlu0 %v667, 34
        %v1414 = vpop.permute.xlu0 %1413
        %1415 = vrot.lane.b32.xlu0 %v668, 34
        %v1416 = vpop.permute.xlu0 %1415
        %vm1417 = vcmask 277504
        %v1418 = vsel %vm1417, %v1414, %v1416
        %v1419 = vunpack.c.l.b16 %v1414
        %v1420 = vunpack.c.h.b16 %v1414
        %v1421 = vunpack.c.l.b16 0
        %v1422 = vunpack.c.h.b16 0
        %vm1423 = vcmp.ne.s32.totalorder %v1419, %v1421
        %vm1424 = vcmp.ne.s32.totalorder %v1420, %v1422
        %vm1425 = vmpackc.low %vm1424, %vm1423
        %v1426 = vunpack.c.l.b16 %v1418
        %v1427 = vunpack.c.h.b16 %v1418
        %v1428 = vunpack.c.l.b16 0
        %v1429 = vunpack.c.h.b16 0
        %vm1430 = vcmp.ne.s32.totalorder %v1426, %v1428
        %vm1431 = vcmp.ne.s32.totalorder %v1427, %v1429
        %vm1432 = vmpackc.low %vm1431, %vm1430
        %v1433 = vunpack.c.l.b16 %v1416
        %v1434 = vunpack.c.h.b16 %v1416
        %v1435 = vunpack.c.l.b16 0
        %v1436 = vunpack.c.h.b16 0
        %vm1437 = vcmp.ne.s32.totalorder %v1433, %v1435
        %vm1438 = vcmp.ne.s32.totalorder %v1434, %v1436
        %vm1439 = vmpackc.low %vm1438, %vm1437
        %v1440 = vsel %vm1425, %v391, 0
        %v1441 = vsel %vm1432, %v384, 0
        %v1442 = vsel %vm1439, %v397, 0
        %v1443 = vsel %vm1425, %v394, 0
        %v1444 = vsel %vm1432, %v385, 0
        %v1445 = vsel %vm1439, %v400, 0
        %1446 = vrot.lane.b32.xlu0 %v477, 96
        %v1447 = vpop.permute.xlu0 %1446
        %1451 = vrot.lane.b32.xlu0 %v1440, 94
        %v1452 = vpop.permute.xlu0 %1451
        %1453 = vrot.lane.b32.xlu0 %v1441, 94
        %v1454 = vpop.permute.xlu0 %1453
        %1455 = vrot.lane.b32.xlu0 %v1442, 94
        %v1456 = vpop.permute.xlu0 %1455
        %vm1457 = vcmask 769024
        %v1458 = vsel %vm1457, %v1452, %v1454
        %v1459 = vsel %vm1457, %v1454, %v1456
        %v1461 = vsel %vm478, %v1447, 0
        %v1464 = vsel %vm482, %v1458, 0
        %v1467 = vsel %vm482, %v1459, 0
        %1469 = vmatpush.bf16.msra.mxu0 0
        %1470 = vmatpush.bf16.msra.mxu0 0
        %1471 = vmatpush.bf16.msra.mxu0 0
        %1472 = vmatpush.bf16.msra.mxu0 0
        %1473 = vmatpush.bf16.msra.mxu0 0
        %1474 = vmatpush.bf16.msra.mxu0 0
        %1475 = vmatpush.bf16.msra.mxu0 0
        %1476 = vmatpush.bf16.msra.mxu0 %v1464
        %1477 = vmatmul.bf16.gmra.mxu0 %v1461
        %v1478 = vpop.f32.mrf.mxu0
        %v1479 = vadd.f32 0.0, %v1478
        %v1480 = vpop.f32.mrf.mxu0
        %v1481 = vadd.f32 0.0, %v1480
        %1482 = vdwg.mxu0
        %1483 = vmatpush.bf16.msra.mxu0 0
        %1484 = vmatpush.bf16.msra.mxu0 0
        %1485 = vmatpush.bf16.msra.mxu0 0
        %1486 = vmatpush.bf16.msra.mxu0 0
        %1487 = vmatpush.bf16.msra.mxu0 0
        %1488 = vmatpush.bf16.msra.mxu0 0
        %1489 = vmatpush.bf16.msra.mxu0 0
        %1490 = vmatpush.bf16.msra.mxu0 %v1467
        %1491 = vmatmul.bf16.gmra.mxu0 %v1461
        %v1492 = vpop.f32.mrf.mxu0
        %v1493 = vadd.f32 0.0, %v1492
        %v1494 = vpop.f32.mrf.mxu0
        %v1495 = vadd.f32 0.0, %v1494
        %1496 = vdwg.mxu0
        %1500 = vrot.lane.b32.xlu0 %v1443, 94
        %v1501 = vpop.permute.xlu0 %1500
        %1502 = vrot.lane.b32.xlu0 %v1444, 94
        %v1503 = vpop.permute.xlu0 %1502
        %1504 = vrot.lane.b32.xlu0 %v1445, 94
        %v1505 = vpop.permute.xlu0 %1504
        %v1506 = vsel %vm1457, %v1501, %v1503
        %v1507 = vsel %vm1457, %v1503, %v1505
        %v1509 = vsel %vm482, %v1506, 0
        %v1512 = vsel %vm482, %v1507, 0
        %1514 = vmatpush.bf16.msra.mxu0 0
        %1515 = vmatpush.bf16.msra.mxu0 0
        %1516 = vmatpush.bf16.msra.mxu0 0
        %1517 = vmatpush.bf16.msra.mxu0 0
        %1518 = vmatpush.bf16.msra.mxu0 0
        %1519 = vmatpush.bf16.msra.mxu0 0
        %1520 = vmatpush.bf16.msra.mxu0 0
        %1521 = vmatpush.bf16.msra.mxu0 %v1509
        %1522 = vmatmul.bf16.gmra.mxu0 %v1461
        %v1523 = vpop.f32.mrf.mxu0
        %v1524 = vadd.f32 0.0, %v1523
        %v1525 = vpop.f32.mrf.mxu0
        %v1526 = vadd.f32 0.0, %v1525
        %1527 = vdwg.mxu0
        %1528 = vmatpush.bf16.msra.mxu0 0
        %1529 = vmatpush.bf16.msra.mxu0 0
        %1530 = vmatpush.bf16.msra.mxu0 0
        %1531 = vmatpush.bf16.msra.mxu0 0
        %1532 = vmatpush.bf16.msra.mxu0 0
        %1533 = vmatpush.bf16.msra.mxu0 0
        %1534 = vmatpush.bf16.msra.mxu0 0
        %1535 = vmatpush.bf16.msra.mxu0 %v1512
        %1536 = vmatmul.bf16.gmra.mxu0 %v1461
        %v1537 = vpop.f32.mrf.mxu0
        %v1538 = vadd.f32 0.0, %v1537
        %v1539 = vpop.f32.mrf.mxu0
        %v1540 = vadd.f32 0.0, %v1539
        %1541 = vdwg.mxu0
        %v1542 = vadd.f32 %v1405, %v1479
        %v1543 = vadd.f32 %v1406, %v1493
        %v1544 = vadd.f32 %v1407, %v1481
        %v1545 = vadd.f32 %v1408, %v1495
        %v1546 = vadd.f32 %v1409, %v1524
        %v1547 = vadd.f32 %v1410, %v1538
        %v1548 = vadd.f32 %v1411, %v1526
        %v1549 = vadd.f32 %v1412, %v1540
        %v1550 = vmax.f32 %v1542, 0.0
        %v1551 = vmax.f32 %v1543, 0.0
        %v1552 = vmax.f32 %v1544, 0.0
        %v1553 = vmax.f32 %v1545, 0.0
        %v1554 = vmax.f32 %v1546, 0.0
        %v1555 = vmax.f32 %v1547, 0.0
        %v1556 = vmax.f32 %v1548, 0.0
        %v1557 = vmax.f32 %v1549, 0.0
        %v1558 = vadd.f32 %v1550, %v1551
        %1559 = vadd.xlane.f32.xlu0 %v1558
        %v1560 = vpop.xlane.xlu0 %1559
        %v1561 = vadd.f32 %v1552, %v1553
        %1562 = vadd.xlane.f32.xlu0 %v1561
        %v1563 = vpop.xlane.xlu0 %1562
        %v1564 = vadd.f32 %v1554, %v1555
        %1565 = vadd.xlane.f32.xlu0 %v1564
        %v1566 = vpop.xlane.xlu0 %1565
        %v1567 = vadd.f32 %v1556, %v1557
        %1568 = vadd.xlane.f32.xlu0 %v1567
        %v1569 = vpop.xlane.xlu0 %1568
        %v1570 = vrcp.pop 256.0
        %v1571 = vmul.f32 256.0, %v1570
        %v1572 = vsub.f32 1.0, %v1571
        %v1573 = vmul.f32 %v1570, %v1572
        %v1574 = vadd.f32 %v1570, %v1573
        %vm1575 = vweird.f32 %v1570
        %v1576 = vsel %vm1575, %v1570, %v1574
        %v1577 = vmul.f32 %v1560, %v1576
        %v1578 = vmul.f32 %v1563, %v1576
        %v1579 = vmul.f32 %v1566, %v1576
        %v1580 = vmul.f32 %v1569, %v1576
        %v1581 = vld [vmem:[#allocation6] sm:$0xff]
        %v1582 = vld [vmem:[#allocation6 + $0x8] sm:$0xff]
        %v1583 = vld [vmem:[%s4] sm:$0x1]
        %v1585 = vperm.slane %v1583, 0
        %v1591 = vperm.slane %v1577, %v403
        %v1592 = vadd.s32 %v403, 4294967288
        %v1593 = vperm.slane %v1578, %v1592
        %vm1594 = vcmask 130112
        %v1595 = vsel %vm1594, %v1593, %v1591
        %v1596 = vperm.slane %v1579, %v403
        %v1597 = vperm.slane %v1580, %v1592
        %v1598 = vsel %vm1594, %v1597, %v1596
        %vm1599 = vcmask 1041409
        %v1600 = vsel %vm1599, %v1598, %v1595
        %vm1601 = vcmask 130048
        %v1602 = vsel %vm1601, %v1600, 0
        %1604 = vmatpush.msra.mxu0 0.0
        %1605 = vmatpush.msra.mxu0 0.0
        %1606 = vmatpush.msra.mxu0 0.0
        %1607 = vmatpush.msra.mxu0 0.0
        %1608 = vmatpush.msra.mxu0 0.0
        %1609 = vmatpush.msra.mxu0 0.0
        %1610 = vmatpush.msra.mxu0 0.0
        %1611 = vmatpush.msra.mxu0 0.0
        %1612 = vmatpush.msra.mxu0 0.0
        %1613 = vmatpush.msra.mxu0 0.0
        %1614 = vmatpush.msra.mxu0 0.0
        %1615 = vmatpush.msra.mxu0 0.0
        %1616 = vmatpush.msra.mxu0 0.0
        %1617 = vmatpush.msra.mxu0 0.0
        %1618 = vmatpush.msra.mxu0 %v1582
        %1619 = vmatpush.msra.mxu0 %v1581
        %1620 = vmatmul.f32.gmra.mxu0 %v1602
        %v1621 = vpop.f32.mrf.mxu0
        %v1622 = vadd.f32 %v1585, %v1621
        %1623 = vdwg.mxu0
        %v1624 = vmax.f32 %v1622, 0.0
        %v1625 = vld [vmem:[#allocation8] sm:$0xff]
        %v1626 = vld [vmem:[#allocation8 + $0x8] sm:$0xff]
        %v1627 = vld [vmem:[#allocation8 + $0x10] sm:$0xff]
        %v1628 = vld [vmem:[#allocation8 + $0x18] sm:$0xff]
        %v1629 = vld [vmem:[%s6] sm:$0x1]
        %v1631 = vperm.slane %v1629, 0
        %vm1633 = vcmask 261120
        %v1635 = vsel %vm1633, %v1624, 0
        %1637 = vmatpush.msra.mxu0 0.0
        %1638 = vmatpush.msra.mxu0 0.0
        %1639 = vmatpush.msra.mxu0 0.0
        %1640 = vmatpush.msra.mxu0 0.0
        %1641 = vmatpush.msra.mxu0 0.0
        %1642 = vmatpush.msra.mxu0 0.0
        %1643 = vmatpush.msra.mxu0 0.0
        %1644 = vmatpush.msra.mxu0 0.0
        %1645 = vmatpush.msra.mxu0 0.0
        %1646 = vmatpush.msra.mxu0 0.0
        %1647 = vmatpush.msra.mxu0 0.0
        %1648 = vmatpush.msra.mxu0 0.0
        %1649 = vmatpush.msra.mxu0 %v1628
        %1650 = vmatpush.msra.mxu0 %v1627
        %1651 = vmatpush.msra.mxu0 %v1626
        %1652 = vmatpush.msra.mxu0 %v1625
        %1653 = vmatmul.f32.gmra.mxu0 %v1635
        %v1654 = vpop.f32.mrf.mxu0
        %v1655 = vadd.f32 %v1631, %v1654
        %1656 = vdwg.mxu0
        %v1657 = vsel %vm482, %v1655, 0.0
        %v1658 = vrot.slane %v1657, 4
        %v1659 = vadd.f32 %v1657, %v1658
        %v1660 = vrot.slane %v1659, 2
        %v1661 = vadd.f32 %v1659, %v1660
        %v1662 = vrot.slane %v1661, 1
        %v1663 = vadd.f32 %v1661, %v1662
        %p1664 = scmp.eq.s32.totalorder %s28, 0
        // Predicated region
        $region61: #{tpu_custom_call.1} parent=47 // pred_check
          %p1665 = pneg %p1664
        $region62: #{tpu_custom_call.1} parent=47 // pred_check_branch
          %1667 = sbr.rel (%p1665) target = $region64
        $region63: #{tpu_custom_call.1} parent=47 // pred_region
          %1668 = vst [vmem:[#allocation2] sm:$0x1] 0.0
        $region64: #{tpu_custom_call.1} parent=47 // pred_fallthru
          _
        %v1669 = vld [vmem:[#allocation2] sm:$0x1]
        %v1670 = vadd.f32 %v1669, %v1663
        %1671 = vst [vmem:[#allocation2] sm:$0x1] %v1670
        // Predicated region
        $region65: #{tpu_custom_call.1} parent=47 // pred_check
          %p1672 = pneg %p1664
        $region66: #{tpu_custom_call.1} parent=47 // pred_check_branch
          %1674 = sbr.rel (%p1672) target = $region68
        $region67: #{tpu_custom_call.1} parent=47 // pred_region
          %v1675 = vld [vmem:[#allocation2] sm:$0x1]
          %v1676 = vmul.f32 %v1675, 0.5
          %1677 = vst [vmem:[%s345] sm:$0x1] %v1676
        $region68: #{tpu_custom_call.1} parent=47 // pred_fallthru
          _
        %s1678 = sand.u32 %s197, 1
        %s1679 = scalar_lea.sflag [#allocation5], %s1678
        %s1680 = sand.u32 %s197, 1
        %s1681 = scalar_lea.vmem [#allocation9], %s1680
        // Predicated region
        $region69: #{tpu_custom_call.1} parent=47 // pred_check
          %p1682 = pneg %p207
        $region70: #{tpu_custom_call.1} parent=47 // pred_check_branch
          %1684 = sbr.rel (%p1682) target = $region72
        $region71: #{tpu_custom_call.1} parent=47 // pred_region
          %1686 = vsyncadd %s1679, 0
          %s1687 = scalar_lea.hbm %s7, %s27
          %s1689 = sshll.u32 %s1681, 4
          %s1690 = int_to_ptr.vmem [resolvable:$true] %s1689
          %s1691 = sshll.u32 %s1687, 4
          %s1692 = int_to_ptr.hbm [resolvable:$true] %s1691
          %1694 = dma.vmem_to_hbm [thread:$0]  %s1690, 16, %s1692, %s1679
        $region72: #{tpu_custom_call.1} parent=47 // pred_fallthru
          _
      $region48: #{tpu_custom_call.1} parent=5 // pred_fallthru
        _
      %p1695 = scmp.le.s32.totalorder 2, %s18
      // Predicated region
      $region73: #{tpu_custom_call.1} parent=5 // pred_check
        %p1696 = pneg %p1695
      $region74: #{tpu_custom_call.1} parent=5 // pred_check_branch
        %1698 = sbr.rel (%p1696) target = $region76
      $region75: #{tpu_custom_call.1} parent=5 // pred_region
        %s1699 = ssub.s32 %s18, 2
        // Predicated region
        $region77: #{tpu_custom_call.1} parent=75 // pred_check
          %p1700 = pneg %p213
        $region78: #{tpu_custom_call.1} parent=75 // pred_check_branch
          %1702 = sbr.rel (%p1700) target = $region80
        $region79: #{tpu_custom_call.1} parent=75 // pred_region
          %s1703 = sand.u32 %s198, 1
          %s1704 = scalar_lea.sflag [#allocation5], %s1703
          %s1705 = sand.u32 %s198, 1
          %s1706 = scalar_lea.vmem [#allocation9], %s1705
          %1708 = dma.done %s1704, 16
        $region80: #{tpu_custom_call.1} parent=75 // pred_fallthru
          _
      $region76: #{tpu_custom_call.1} parent=5 // pred_fallthru
        _
    $region6: #{tpu_custom_call.1} parent=1 // loop_footer
      %s22 = sadd.s32 1, %s18
    $region7: #{tpu_custom_call.1} parent=1 // loop_footer_branch
      %17 = sbr.rel target = $region3
    $region8: #{tpu_custom_call.1} parent=1 // loop_exit
      _
    %1709 = vsyncpa [#allocation4], 1
    %s1710 = scalar_lea.sflag [#allocation4], 1
    %1711 = vsyncpa %s1710, 1
    %1712 = vsyncpa [#allocation7], 1
    %1713 = vsyncpa [#allocation5], 1
    %s1714 = scalar_lea.sflag [#allocation5], 1
    %1715 = vsyncpa %s1714, 1

</llo_original>
